<compile_context>
chip_gen: v7x
topology: tpu7x:2x2x1
jax: 0.10.0
libtpu: 0.0.40
codegen_flags: <defaults>
</compile_context>

<pallas_src>
import jax
import jax.numpy as jnp
from jax.experimental import pallas as pl
from jax.experimental.pallas import tpu as pltpu

_EPS = 1e-5        # torch.nn.LayerNorm default
_NORM_EPS = 1e-12  # guards the P2S cosine rsqrt (avoids NaN on an all-zero row)
_LANE = 128


def _round_up(x, m):
    return ((x + m - 1) // m) * m


def _vmem_limit_bytes():
    """Generation-aware VMEM budget: physical capacity minus 16 MiB headroom."""
    cap = 64 * 1024 * 1024
    try:
        info = pltpu.get_tpu_info()
        for name in ("vmem_capacity_bytes", "vmem_size_bytes", "vmem_bytes"):
            v = getattr(info, name, None)
            if v:
                cap = int(v)
                break
    except Exception:
        pass
    return max(32 * 1024 * 1024, cap - 16 * 1024 * 1024)


_VMEM_LIMIT = _vmem_limit_bytes()


# ----------------------------------------------------------------------------
# Kernel 1: weighted SSL-layer fusion (softmax weights in wrapper, blocked over layers)
# ----------------------------------------------------------------------------
def _layer_block(L, T, D, limit):
    """Largest divisor of L whose [lb, T, D] f32 block fits a slice of the VMEM budget."""
    per = T * D * 4
    budget = max(per, limit // 6)
    best = 1
    for lb in range(1, L + 1):
        if L % lb == 0 and lb * per <= budget:
            best = lb
    return best


def layer_fuse_call(layer_feats, norm_w):
    """layer_feats: [L, B, T, D] f32, norm_w: [L] f32 (already softmaxed).  Returns [B, T, D]."""
    L, B, T, D = layer_feats.shape
    lb = _layer_block(L, T, D, _VMEM_LIMIT)

    def kernel(w_ref, f_ref, o_ref):
        j = pl.program_id(1)
        acc = w_ref[j * lb] * f_ref[0]
        for i in range(1, lb):                 # unrolled: lb is static
            acc = acc + w_ref[j * lb + i] * f_ref[i]

        @pl.when(j == 0)
        def _():
            o_ref[...] = acc

        @pl.when(j > 0)
        def _():
            o_ref[...] += acc

    return pl.pallas_call(
        kernel,
        out_shape=jax.ShapeDtypeStruct((B, T, D), jnp.float32),
        grid=(B, L // lb),
        in_specs=[
            pl.BlockSpec(memory_space=pltpu.MemorySpace.SMEM),               # [L] weights
            pl.BlockSpec((lb, None, T, D), lambda b, j: (j, b, 0, 0)),       # lb-layer slab
        ],
        out_specs=pl.BlockSpec((None, T, D), lambda b, j: (b, 0, 0)),        # resident over j
        compiler_params=pltpu.CompilerParams(
            dimension_semantics=("parallel", "arbitrary"),
            vmem_limit_bytes=_VMEM_LIMIT,
        ),
    )(norm_w, layer_feats)


# ----------------------------------------------------------------------------
# Kernel 2: fused dual-branch gMLP stack (batch-blocked, fused w1, padded fh, fused utt pool)
# ----------------------------------------------------------------------------
def _prep_stack_params(blocks, T):
    """Pad fh to a lane tile, fuse the two SGU halves, pack the tiny row params into a slab."""
    D = blocks["w1"].shape[-2]
    edim = blocks["w1"].shape[-1]
    fh = edim // 2
    fh_pad = _round_up(fh, _LANE)
    E = 2 * fh_pad
    P = max(D, E)

    def pad_last(x, width):
        return jnp.pad(x, [(0, 0)] * (x.ndim - 1) + [(0, width - x.shape[-1])])

    w1a = pad_last(blocks["w1"][..., :fh], fh_pad)
    w1b = pad_last(blocks["w1"][..., fh:], fh_pad)
    w1p = jnp.concatenate([w1a, w1b], axis=-1).astype(jnp.bfloat16)       # [2,nl,D,E]

    b1a = pad_last(blocks["b1"][..., :fh], fh_pad)
    b1b = pad_last(blocks["b1"][..., fh:], fh_pad)
    b1p = jnp.concatenate([b1a, b1b], axis=-1)                            # [2,nl,1,E]

    slab = jnp.concatenate([                                              # [2,nl,6,P]
        pad_last(blocks["ln1_g"], P),
        pad_last(blocks["ln1_b"], P),
        pad_last(b1p, P),
        pad_last(blocks["ln2_g"], P),        # zeros beyond fh keep padded columns at 0
        pad_last(blocks["ln2_b"], P),
        pad_last(blocks["b2"], P),
    ], axis=2)

    wspp = blocks["wsp"][..., :T, :T].astype(jnp.bfloat16)                # weight[:T,:T]
    bspp = blocks["bsp"][..., :T, :]                                      # [2,nl,T,1] f32
    w2p = jnp.pad(blocks["w2"],
                  [(0, 0), (0, 0), (0, fh_pad - fh), (0, 0)]).astype(jnp.bfloat16)
    return slab, w1p, wspp, bspp, w2p, fh, fh_pad


def _pick_batch_block(B, T, D, fh_pad, P, limit):
    """Largest divisor of B whose working set fits ~60% of the VMEM budget."""
    act = T * D * 4
    fixed = 2 * (D * 2 * fh_pad * 2     # w1 bf16 (double buffered)
                 + fh_pad * D * 2       # w2 bf16
                 + T * T * 2            # wsp bf16
                 + 6 * P * 4            # packed small params
                 + T * _LANE * 4)       # bsp (lane-padded buffer)
    best = 1
    for bb in range(1, B + 1):
        if B % bb != 0:
            continue
        if bb != B and (bb * T) % 8 != 0:
            continue
        if fixed + bb * act * 5 <= int(limit * 0.6):   # scratch + 2x in + 2x out buffers
            best = bb
    return best


def gmlp_stack_call(hidd, blocks, T, B):
    """hidd: [B, T, D] f32.  Returns:
       out_full [2, B*T, D]  (branch 0 = frame branch, branch 1 = utterance branch)
       out_pool [2, B, 1, D] (mean over T, fused into the last-layer epilogue)."""
    D = hidd.shape[-1]
    n_layers = blocks["w1"].shape[1]
    slab, w1p, wspp, bspp, w2p, fh, fh_pad = _prep_stack_params(blocks, T)
    P = slab.shape[-1]
    E = 2 * fh_pad
    bb = _pick_batch_block(B, T, D, fh_pad, P, _VMEM_LIMIT)
    rows = bb * T
    inv_fh = 1.0 / fh

    def kernel(x_ref, sp_ref, w1_ref, wsp_ref, bsp_ref, w2_ref,
               o_ref, op_ref, acc_ref):
        l = pl.program_id(2)
        last = pl.num_programs(2) - 1

        @pl.when(l == 0)
        def _():
            acc_ref[...] = x_ref[...]

        xv = acc_ref[...]                                    # [bb*T, D] f32, VMEM-resident
        sp = sp_ref[...]                                     # [6, P] packed row params
        ln1_g, ln1_b = sp[0:1, :D], sp[1:2, :D]
        b1 = sp[2:3, :E]
        ln2_g, ln2_b = sp[3:4, :fh_pad], sp[4:5, :fh_pad]
        b2 = sp[5:6, :D]

        # pre-LayerNorm over D (single-pass variance, f32)
        mu = jnp.mean(xv, axis=-1, keepdims=True)
        var = jnp.maximum(jnp.mean(xv * xv, axis=-1, keepdims=True) - mu * mu, 0.0)
        xn = (xv - mu) * jax.lax.rsqrt(var + _EPS) * ln1_g + ln1_b

        # fused channel projection (both SGU halves in one MXU launch) + GELU
        z = jnp.dot(xn.astype(jnp.bfloat16), w1_ref[...],
                    preferred_element_type=jnp.float32) + b1
        z = jax.nn.gelu(z, approximate=True)
        z1, z2 = z[:, :fh_pad], z[:, fh_pad:]

        # LayerNorm on the gate half (padded columns are exactly 0 -> divide by real fh)
        mu2 = jnp.sum(z2, axis=-1, keepdims=True) * inv_fh
        var2 = jnp.maximum(jnp.sum(z2 * z2, axis=-1, keepdims=True) * inv_fh - mu2 * mu2, 0.0)
        z2 = (z2 - mu2) * jax.lax.rsqrt(var2 + _EPS) * ln2_g + ln2_b

        # spatial gating: per-batch-item [T, T] @ [T, fh_pad]
        wsp = wsp_ref[...]
        bsp = bsp_ref[...]
        parts = [jnp.dot(wsp, z2[b * T:(b + 1) * T, :].astype(jnp.bfloat16),
                         preferred_element_type=jnp.float32) + bsp
                 for b in range(bb)]
        sg = parts[0] if bb == 1 else jnp.concatenate(parts, axis=0)

        # gate, output projection, residual
        y = jnp.dot((z1 * sg).astype(jnp.bfloat16), w2_ref[...],
                    preferred_element_type=jnp.float32) + b2
        out = xv + y

        @pl.when(l < last)
        def _():
            acc_ref[...] = out

        @pl.when(l == last)
        def _():
            o_ref[...] = out                                  # direct write, no acc copy
            for b in range(bb):                               # fused utterance mean-pool
                op_ref[b, :, :] = jnp.mean(out[b * T:(b + 1) * T, :],
                                           axis=0, keepdims=True)

    def wspec(r, c):  # per-(branch, layer) weight slab, kernel sees [r, c]
        return pl.BlockSpec((None, None, r, c), lambda br, i, l: (br, l, 0, 0))

    hidd_flat = hidd.reshape(B * T, D)
    out_full, out_pool = pl.pallas_call(
        kernel,
        out_shape=(jax.ShapeDtypeStruct((2, B * T, D), jnp.float32),
                   jax.ShapeDtypeStruct((2, B, 1, D), jnp.float32)),
        grid=(2, B // bb, n_layers),
        in_specs=[
            pl.BlockSpec((rows, D), lambda br, i, l: (i, 0)),   # activation, shared branches
            wspec(6, P),                                        # packed LN/bias slab
            wspec(D, E),                                        # fused proj1
            wspec(T, T),                                        # spatial weight
            wspec(T, 1),                                        # spatial bias
            wspec(fh_pad, D),                                   # proj2
        ],
        out_specs=(
            pl.BlockSpec((None, rows, D), lambda br, i, l: (br, i, 0)),
            pl.BlockSpec((None, bb, 1, D), lambda br, i, l: (br, i, 0, 0)),
        ),
        scratch_shapes=[pltpu.VMEM((rows, D), jnp.float32)],
        compiler_params=pltpu.CompilerParams(
            dimension_semantics=("parallel", "parallel", "arbitrary"),
            vmem_limit_bytes=_VMEM_LIMIT,
        ),
    )(hidd_flat, slab, w1p, wspp, bspp, w2p)
    return out_full, out_pool


# ----------------------------------------------------------------------------
# Kernel 3: head (gMLP fc + P2S cosine), lane-dense [N_pad, 128] output, padded cdiv grid
# ----------------------------------------------------------------------------
def frame_head_call(x, wfc, wp2s_unit, *, row_cap=256):
    """x: [N, D] f32.  wfc: [D, E_pad] bf16.  wp2s_unit: [E_pad, 128] bf16 unit columns.
    Returns [N, 2] cosine logits."""
    N, D = x.shape
    E = wfc.shape[1]
    tm = min(row_cap, _round_up(N, 8))
    n_pad = _round_up(N, tm)
    if n_pad != N:
        x = jnp.pad(x, ((0, n_pad - N), (0, 0)))   # zero rows -> zero cosine, sliced off below

    def kernel(x_ref, wfc_ref, wp_ref, o_ref):
        y = jnp.dot(x_ref[...].astype(jnp.bfloat16), wfc_ref[...],
                    preferred_element_type=jnp.float32)
        inv_x = jax.lax.rsqrt(jnp.sum(y * y, axis=-1, keepdims=True) + _NORM_EPS)
        cos = jnp.dot(y.astype(jnp.bfloat16), wp_ref[...],
                      preferred_element_type=jnp.float32) * inv_x
        o_ref[...] = jnp.clip(cos, -1.0, 1.0)

    out = pl.pallas_call(
        kernel,
        out_shape=jax.ShapeDtypeStruct((n_pad, _LANE), jnp.float32),
        grid=(n_pad // tm,),
        in_specs=[
            pl.BlockSpec((tm, D), lambda i: (i, 0)),
            pl.BlockSpec((D, E), lambda i: (0, 0)),
            pl.BlockSpec((E, _LANE), lambda i: (0, 0)),
        ],
        out_specs=pl.BlockSpec((tm, _LANE), lambda i: (i, 0)),
        compiler_params=pltpu.CompilerParams(
            dimension_semantics=("parallel",),
            vmem_limit_bytes=_VMEM_LIMIT,
        ),
    )(x, wfc, wp2s_unit)
    return out[:N, :2]


# ----------------------------------------------------------------------------
# Glue: parameter init + forward
# ----------------------------------------------------------------------------
def p2s_unit_cols(w, rows_pad, pad_to=_LANE):
    # torch: weight.renorm(2, 1, 1e-5).mul(1e5) then cos = x@w / |x| / |w| == projection onto
    # unit-norm column directions; fold 1/|w| into the weight once here, zero-pad rows to the
    # padded embedding dim and columns to a full lane tile.
    col_norm = jnp.sqrt(jnp.sum(w * w, axis=0, keepdims=True))
    w_unit = w / jnp.maximum(col_norm, _NORM_EPS)
    w_unit = jnp.pad(w_unit, ((0, rows_pad - w.shape[0]), (0, pad_to - w.shape[1])))
    return w_unit.astype(jnp.bfloat16)


def init_params(key, d_model, edim, max_seq_len, n_gmlp_layers, n_ssl_weights=30):
    fh = edim // 2
    ks = jax.random.split(key, 7)
    shp = (2, n_gmlp_layers)  # leading dims: [branch (cl frame, utt), gmlp layer]
    blocks = dict(
        ln1_g=jnp.ones(shp + (1, d_model), jnp.float32),
        ln1_b=jnp.zeros(shp + (1, d_model), jnp.float32),
        w1=jax.random.normal(ks[0], shp + (d_model, edim), jnp.float32) * d_model ** -0.5,
        b1=jnp.zeros(shp + (1, edim), jnp.float32),
        ln2_g=jnp.ones(shp + (1, fh), jnp.float32),
        ln2_b=jnp.zeros(shp + (1, fh), jnp.float32),
        wsp=jax.random.uniform(ks[1], shp + (max_seq_len, max_seq_len), jnp.float32,
                               -0.01, 0.01),
        bsp=jnp.ones(shp + (max_seq_len, 1), jnp.float32),
        w2=jax.random.normal(ks[2], shp + (fh, d_model), jnp.float32) * fh ** -0.5,
        b2=jnp.zeros(shp + (1, d_model), jnp.float32),
    )

    def p2s_init(k):
        w = jax.random.uniform(k, (edim, 2), jnp.float32, -1.0, 1.0)
        return w / jnp.sqrt(jnp.sum(w * w, axis=0, keepdims=True))

    return dict(
        ssl_layer_weights=jnp.ones((n_ssl_weights,), jnp.float32),
        blocks=blocks,
        cl_fc=jax.random.normal(ks[3], (d_model, edim), jnp.float32) * d_model ** -0.5,
        cl_p2s=p2s_init(ks[4]),
        utt_fc=jax.random.normal(ks[5], (d_model, edim), jnp.float32) * d_model ** -0.5,
        utt_p2s=p2s_init(ks[6]),
    )


def multireso_forward(layer_feats, params):
    # layer_feats: [L, B, T, D]  (stacked SSL layer_results, already time-major per batch)
    L, B, T, D = layer_feats.shape

    # extract_ssl_feat: softmax(layer_weights[:L]) weighted sum over layers.
    # NOTE: kept as its own kernel rather than fused into the stack's l==0 init — the stack
    # would re-fetch all L layer slabs per branch, which is more HBM traffic than one fused pass.
    norm_w = jax.nn.softmax(params["ssl_layer_weights"][:L])
    hidd = layer_fuse_call(layer_feats, norm_w)                               # [B, T, D]

    # Both gMLP stacks (frame + utterance) in one fused, batch-blocked kernel; the utterance
    # mean-pool comes out of the epilogue so the branch-1 activation is never re-read.
    stack_full, stack_pool = gmlp_stack_call(hidd, params["blocks"], T, B)

    edim = params["cl_fc"].shape[1]
    e_pad = _round_up(edim, _LANE)
    cl_fc = jnp.pad(params["cl_fc"], ((0, 0), (0, e_pad - edim))).astype(jnp.bfloat16)
    utt_fc = jnp.pad(params["utt_fc"], ((0, 0), (0, e_pad - edim))).astype(jnp.bfloat16)
    cl_p2s = p2s_unit_cols(params["cl_p2s"], e_pad)
    utt_p2s = p2s_unit_cols(params["utt_p2s"], e_pad)

    logits = []
    # scale 0: ds_block = Identity, cl_block = gMLP (+fc), ac_block = P2SActivationLayer
    logits.append(frame_head_call(stack_full[0], cl_fc, cl_p2s))              # [B*T, 2]

    # include_utt branch: Dropout(0.7) -> identity (eval), gMLP mean-pool (fused), fc, P2S
    pooled = stack_pool[1, :, 0, :]                                           # [B, D]
    logits.append(frame_head_call(pooled, utt_fc, utt_p2s))                   # [B, 2]

    masks = []  # use_mask=False
    return logits, masks


if __name__ == "__main__":
    # small, shape-consistent configuration:
    #   ssl_dim D=32, edim=D//2=16, L=6 SSL layers, B=2, T=8, max_seq_len=16, 2 gMLP layers
    L, B, T, D = 6, 2, 8, 32
    EDIM = D // 2
    MAX_SEQ_LEN = 16
    NUM_GMLP_LAYERS = 2

    key = jax.random.PRNGKey(0)
    k_feat, k_par = jax.random.split(key)
    layer_feats = jax.random.normal(k_feat, (L, B, T, D), jnp.float32)
    params = init_params(k_par, D, EDIM, MAX_SEQ_LEN, NUM_GMLP_LAYERS)

    fwd = jax.jit(multireso_forward)
    logits, masks = fwd(layer_feats, params)
    logits = jax.block_until_ready(logits)

    assert logits[0].shape == (B * T, 2)
    assert logits[1].shape == (B, 2)
    assert bool(jnp.all(jnp.isfinite(logits[0]))) and bool(jnp.all(jnp.isfinite(logits[1])))
    assert bool(jnp.all(jnp.abs(logits[0]) <= 1.0)) and bool(jnp.all(jnp.abs(logits[1]) <= 1.0))
    print("KERNEL_OK")
</pallas_src>

<mosaic_0001>
module attributes {stable_mosaic.version = 11 : i64} {
  func.func @kernel(%arg0: i32, %arg1: i32, %arg2: memref<6xf32, #tpu.memory_space<smem>>, %arg3: memref<6x1x8x32xf32, #tpu.memory_space<vmem>>, %arg4: memref<1x8x32xf32, #tpu.memory_space<vmem>>) attributes {dimension_semantics = [#tpu.dimension_semantics<parallel>, #tpu.dimension_semantics<arbitrary>], iteration_bounds = array<i64: 2, 1>, scalar_prefetch = 0 : i64, scratch_operands = 0 : i64, tpu.core_type = #tpu.core_type<tc>, window_params = [{transform_indices = @transform_0, window_bounds = array<i64: 6>}, {transform_indices = @transform_1, window_bounds = array<i64: 6, 1, 8, 32>}, {transform_indices = @transform_2, window_bounds = array<i64: 1, 8, 32>}]} {
    %c6_i32 = arith.constant 6 : i32
    %0 = arith.muli %arg1, %c6_i32 : i32
    %1 = arith.index_cast %0 : i32 to index
    %2 = memref.load %arg2[%1] : memref<6xf32, #tpu.memory_space<smem>>
    %c0 = arith.constant 0 : index
    %c0_0 = arith.constant 0 : index
    %c0_1 = arith.constant 0 : index
    %c0_2 = arith.constant 0 : index
    %3 = vector.load %arg3[%c0, %c0_0, %c0_1, %c0_2] : memref<6x1x8x32xf32, #tpu.memory_space<vmem>>, vector<1x1x8x32xf32>
    %4 = vector.shape_cast %3 : vector<1x1x8x32xf32> to vector<8x32xf32>
    %5 = vector.broadcast %2 : f32 to vector<8x32xf32>
    %6 = arith.mulf %5, %4 : vector<8x32xf32>
    %c6_i32_3 = arith.constant 6 : i32
    %7 = arith.muli %arg1, %c6_i32_3 : i32
    %c1_i32 = arith.constant 1 : i32
    %8 = arith.addi %7, %c1_i32 : i32
    %9 = arith.index_cast %8 : i32 to index
    %10 = memref.load %arg2[%9] : memref<6xf32, #tpu.memory_space<smem>>
    %c1 = arith.constant 1 : index
    %c0_4 = arith.constant 0 : index
    %c0_5 = arith.constant 0 : index
    %c0_6 = arith.constant 0 : index
    %11 = vector.load %arg3[%c1, %c0_4, %c0_5, %c0_6] : memref<6x1x8x32xf32, #tpu.memory_space<vmem>>, vector<1x1x8x32xf32>
    %12 = vector.shape_cast %11 : vector<1x1x8x32xf32> to vector<8x32xf32>
    %13 = vector.broadcast %10 : f32 to vector<8x32xf32>
    %14 = arith.mulf %13, %12 : vector<8x32xf32>
    %15 = arith.addf %6, %14 : vector<8x32xf32>
    %c6_i32_7 = arith.constant 6 : i32
    %16 = arith.muli %arg1, %c6_i32_7 : i32
    %c2_i32 = arith.constant 2 : i32
    %17 = arith.addi %16, %c2_i32 : i32
    %18 = arith.index_cast %17 : i32 to index
    %19 = memref.load %arg2[%18] : memref<6xf32, #tpu.memory_space<smem>>
    %c2 = arith.constant 2 : index
    %c0_8 = arith.constant 0 : index
    %c0_9 = arith.constant 0 : index
    %c0_10 = arith.constant 0 : index
    %20 = vector.load %arg3[%c2, %c0_8, %c0_9, %c0_10] : memref<6x1x8x32xf32, #tpu.memory_space<vmem>>, vector<1x1x8x32xf32>
    %21 = vector.shape_cast %20 : vector<1x1x8x32xf32> to vector<8x32xf32>
    %22 = vector.broadcast %19 : f32 to vector<8x32xf32>
    %23 = arith.mulf %22, %21 : vector<8x32xf32>
    %24 = arith.addf %15, %23 : vector<8x32xf32>
    %c6_i32_11 = arith.constant 6 : i32
    %25 = arith.muli %arg1, %c6_i32_11 : i32
    %c3_i32 = arith.constant 3 : i32
    %26 = arith.addi %25, %c3_i32 : i32
    %27 = arith.index_cast %26 : i32 to index
    %28 = memref.load %arg2[%27] : memref<6xf32, #tpu.memory_space<smem>>
    %c3 = arith.constant 3 : index
    %c0_12 = arith.constant 0 : index
    %c0_13 = arith.constant 0 : index
    %c0_14 = arith.constant 0 : index
    %29 = vector.load %arg3[%c3, %c0_12, %c0_13, %c0_14] : memref<6x1x8x32xf32, #tpu.memory_space<vmem>>, vector<1x1x8x32xf32>
    %30 = vector.shape_cast %29 : vector<1x1x8x32xf32> to vector<8x32xf32>
    %31 = vector.broadcast %28 : f32 to vector<8x32xf32>
    %32 = arith.mulf %31, %30 : vector<8x32xf32>
    %33 = arith.addf %24, %32 : vector<8x32xf32>
    %c6_i32_15 = arith.constant 6 : i32
    %34 = arith.muli %arg1, %c6_i32_15 : i32
    %c4_i32 = arith.constant 4 : i32
    %35 = arith.addi %34, %c4_i32 : i32
    %36 = arith.index_cast %35 : i32 to index
    %37 = memref.load %arg2[%36] : memref<6xf32, #tpu.memory_space<smem>>
    %c4 = arith.constant 4 : index
    %c0_16 = arith.constant 0 : index
    %c0_17 = arith.constant 0 : index
    %c0_18 = arith.constant 0 : index
    %38 = vector.load %arg3[%c4, %c0_16, %c0_17, %c0_18] : memref<6x1x8x32xf32, #tpu.memory_space<vmem>>, vector<1x1x8x32xf32>
    %39 = vector.shape_cast %38 : vector<1x1x8x32xf32> to vector<8x32xf32>
    %40 = vector.broadcast %37 : f32 to vector<8x32xf32>
    %41 = arith.mulf %40, %39 : vector<8x32xf32>
    %42 = arith.addf %33, %41 : vector<8x32xf32>
    %c6_i32_19 = arith.constant 6 : i32
    %43 = arith.muli %arg1, %c6_i32_19 : i32
    %c5_i32 = arith.constant 5 : i32
    %44 = arith.addi %43, %c5_i32 : i32
    %45 = arith.index_cast %44 : i32 to index
    %46 = memref.load %arg2[%45] : memref<6xf32, #tpu.memory_space<smem>>
    %c5 = arith.constant 5 : index
    %c0_20 = arith.constant 0 : index
    %c0_21 = arith.constant 0 : index
    %c0_22 = arith.constant 0 : index
    %47 = vector.load %arg3[%c5, %c0_20, %c0_21, %c0_22] : memref<6x1x8x32xf32, #tpu.memory_space<vmem>>, vector<1x1x8x32xf32>
    %48 = vector.shape_cast %47 : vector<1x1x8x32xf32> to vector<8x32xf32>
    %49 = vector.broadcast %46 : f32 to vector<8x32xf32>
    %50 = arith.mulf %49, %48 : vector<8x32xf32>
    %51 = arith.addf %42, %50 : vector<8x32xf32>
    %c0_i32 = arith.constant 0 : i32
    %52 = arith.cmpi eq, %arg1, %c0_i32 : i32
    %53 = arith.extui %52 : i1 to i32
    %c0_i32_23 = arith.constant 0 : i32
    %54 = arith.cmpi ne, %53, %c0_i32_23 : i32
    scf.if %54 {
      %c0_26 = arith.constant 0 : index
      %c0_27 = arith.constant 0 : index
      %c0_28 = arith.constant 0 : index
      %58 = vector.load %arg4[%c0_26, %c0_27, %c0_28] : memref<1x8x32xf32, #tpu.memory_space<vmem>>, vector<1x8x32xf32>
      %59 = vector.shape_cast %58 : vector<1x8x32xf32> to vector<8x32xf32>
      %60 = vector.shape_cast %51 : vector<8x32xf32> to vector<1x8x32xf32>
      tpu.vector_store %arg4[%c0_26, %c0_27, %c0_28], %60 {strides = array<i32>} : memref<1x8x32xf32, #tpu.memory_space<vmem>>, vector<1x8x32xf32>,
    } else {
    }
    %c0_i32_24 = arith.constant 0 : i32
    %55 = arith.cmpi sgt, %arg1, %c0_i32_24 : i32
    %56 = arith.extui %55 : i1 to i32
    %c0_i32_25 = arith.constant 0 : i32
    %57 = arith.cmpi ne, %56, %c0_i32_25 : i32
    scf.if %57 {
      %c0_26 = arith.constant 0 : index
      %c0_27 = arith.constant 0 : index
      %c0_28 = arith.constant 0 : index
      %58 = vector.load %arg4[%c0_26, %c0_27, %c0_28] : memref<1x8x32xf32, #tpu.memory_space<vmem>>, vector<1x8x32xf32>
      %59 = vector.shape_cast %58 : vector<1x8x32xf32> to vector<8x32xf32>
      %60 = arith.addf %59, %51 : vector<8x32xf32>
      %c0_29 = arith.constant 0 : index
      %c0_30 = arith.constant 0 : index
      %c0_31 = arith.constant 0 : index
      %61 = vector.load %arg4[%c0_29, %c0_30, %c0_31] : memref<1x8x32xf32, #tpu.memory_space<vmem>>, vector<1x8x32xf32>
      %62 = vector.shape_cast %61 : vector<1x8x32xf32> to vector<8x32xf32>
      %63 = vector.shape_cast %60 : vector<8x32xf32> to vector<1x8x32xf32>
      tpu.vector_store %arg4[%c0_29, %c0_30, %c0_31], %63 {strides = array<i32>} : memref<1x8x32xf32, #tpu.memory_space<vmem>>, vector<1x8x32xf32>,
    } else {
    }
    return
  }
  func.func @transform_0(%arg0: i32, %arg1: i32) -> i32 {
    %c0_i32 = arith.constant 0 : i32
    %c0_i32_0 = arith.constant 0 : i32
    return %c0_i32 : i32
  }
  func.func @transform_1(%arg0: i32, %arg1: i32) -> (i32, i32, i32, i32) {
    %c0_i32 = arith.constant 0 : i32
    %c0_i32_0 = arith.constant 0 : i32
    %c0_i32_1 = arith.constant 0 : i32
    return %arg1, %arg0, %c0_i32, %c0_i32_0 : i32, i32, i32, i32
  }
  func.func @transform_2(%arg0: i32, %arg1: i32) -> (i32, i32, i32) {
    %c0_i32 = arith.constant 0 : i32
    %c0_i32_0 = arith.constant 0 : i32
    %c0_i32_1 = arith.constant 0 : i32
    return %arg0, %c0_i32, %c0_i32_0 : i32, i32, i32
  }
}

module attributes {stable_mosaic.version = 11 : i64} {
  func.func @kernel(%arg0: i32, %arg1: i32, %arg2: i32, %arg3: memref<16x32xf32, #tpu.memory_space<vmem>>, %arg4: memref<1x1x6x256xf32, #tpu.memory_space<vmem>>, %arg5: memref<1x1x32x256xbf16, #tpu.memory_space<vmem>>, %arg6: memref<1x1x8x8xbf16, #tpu.memory_space<vmem>>, %arg7: memref<1x1x8x1xf32, #tpu.memory_space<vmem>>, %arg8: memref<1x1x128x32xbf16, #tpu.memory_space<vmem>>, %arg9: memref<1x16x32xf32, #tpu.memory_space<vmem>>, %arg10: memref<1x2x1x32xf32, #tpu.memory_space<vmem>>, %arg11: memref<16x32xf32, #tpu.memory_space<vmem>>) attributes {dimension_semantics = [#tpu.dimension_semantics<parallel>, #tpu.dimension_semantics<parallel>, #tpu.dimension_semantics<arbitrary>], iteration_bounds = array<i64: 2, 1, 2>, scalar_prefetch = 0 : i64, scratch_operands = 1 : i64, tpu.core_type = #tpu.core_type<tc>, window_params = [{transform_indices = @transform_0, window_bounds = array<i64: 16, 32>}, {transform_indices = @transform_1, window_bounds = array<i64: 1, 1, 6, 256>}, {transform_indices = @transform_2, window_bounds = array<i64: 1, 1, 32, 256>}, {transform_indices = @transform_3, window_bounds = array<i64: 1, 1, 8, 8>}, {transform_indices = @transform_4, window_bounds = array<i64: 1, 1, 8, 1>}, {transform_indices = @transform_5, window_bounds = array<i64: 1, 1, 128, 32>}, {transform_indices = @transform_6, window_bounds = array<i64: 1, 16, 32>}, {transform_indices = @transform_7, window_bounds = array<i64: 1, 2, 1, 32>}]} {
    %c0_i32 = arith.constant 0 : i32
    %0 = arith.cmpi eq, %arg2, %c0_i32 : i32
    %1 = arith.extui %0 : i1 to i32
    %c0_i32_0 = arith.constant 0 : i32
    %2 = arith.cmpi ne, %1, %c0_i32_0 : i32
    scf.if %2 {
      %c0_44 = arith.constant 0 : index
      %c0_45 = arith.constant 0 : index
      %110 = vector.load %arg3[%c0_44, %c0_45] : memref<16x32xf32, #tpu.memory_space<vmem>>, vector<16x32xf32>
      %c0_46 = arith.constant 0 : index
      %c0_47 = arith.constant 0 : index
      %111 = vector.load %arg11[%c0_46, %c0_47] : memref<16x32xf32, #tpu.memory_space<vmem>>, vector<16x32xf32>
      tpu.vector_store %arg11[%c0_46, %c0_47], %110 {strides = array<i32>} : memref<16x32xf32, #tpu.memory_space<vmem>>, vector<16x32xf32>,
    } else {
    }
    %c0 = arith.constant 0 : index
    %c0_1 = arith.constant 0 : index
    %3 = vector.load %arg11[%c0, %c0_1] : memref<16x32xf32, #tpu.memory_space<vmem>>, vector<16x32xf32>
    %c0_2 = arith.constant 0 : index
    %c0_3 = arith.constant 0 : index
    %c0_4 = arith.constant 0 : index
    %c0_5 = arith.constant 0 : index
    %4 = vector.load %arg4[%c0_2, %c0_3, %c0_4, %c0_5] : memref<1x1x6x256xf32, #tpu.memory_space<vmem>>, vector<1x1x6x256xf32>
    %5 = vector.shape_cast %4 : vector<1x1x6x256xf32> to vector<6x256xf32>
    %6 = vector.extract_strided_slice %5 {offsets = [0, 0], sizes = [1, 32], strides = [1, 1]} : vector<6x256xf32> to vector<1x32xf32>
    %7 = vector.extract_strided_slice %5 {offsets = [1, 0], sizes = [1, 32], strides = [1, 1]} : vector<6x256xf32> to vector<1x32xf32>
    %8 = vector.extract_strided_slice %5 {offsets = [2, 0], sizes = [1, 256], strides = [1, 1]} : vector<6x256xf32> to vector<1x256xf32>
    %9 = vector.extract_strided_slice %5 {offsets = [3, 0], sizes = [1, 128], strides = [1, 1]} : vector<6x256xf32> to vector<1x128xf32>
    %10 = vector.extract_strided_slice %5 {offsets = [4, 0], sizes = [1, 128], strides = [1, 1]} : vector<6x256xf32> to vector<1x128xf32>
    %11 = vector.extract_strided_slice %5 {offsets = [5, 0], sizes = [1, 32], strides = [1, 1]} : vector<6x256xf32> to vector<1x32xf32>
    %cst = arith.constant dense<0.000000e+00> : vector<16xf32>
    %12 = vector.multi_reduction <add>, %3, %cst [1] : vector<16x32xf32> to vector<16xf32>
    %13 = vector.shape_cast %12 : vector<16xf32> to vector<16x1xf32>
    %cst_6 = arith.constant 3.200000e+01 : f32
    %14 = vector.broadcast %cst_6 : f32 to vector<16x1xf32>
    %15 = arith.divf %13, %14 : vector<16x1xf32>
    %16 = arith.mulf %3, %3 : vector<16x32xf32>
    %cst_7 = arith.constant dense<0.000000e+00> : vector<16xf32>
    %17 = vector.multi_reduction <add>, %16, %cst_7 [1] : vector<16x32xf32> to vector<16xf32>
    %18 = vector.shape_cast %17 : vector<16xf32> to vector<16x1xf32>
    %cst_8 = arith.constant 3.200000e+01 : f32
    %19 = vector.broadcast %cst_8 : f32 to vector<16x1xf32>
    %20 = arith.divf %18, %19 : vector<16x1xf32>
    %21 = arith.mulf %15, %15 : vector<16x1xf32>
    %22 = arith.subf %20, %21 : vector<16x1xf32>
    %cst_9 = arith.constant 0.000000e+00 : f32
    %23 = vector.broadcast %cst_9 : f32 to vector<16x1xf32>
    %24 = arith.maximumf %22, %23 : vector<16x1xf32>
    %25 = vector.broadcast %15 : vector<16x1xf32> to vector<16x32xf32>
    %26 = arith.subf %3, %25 : vector<16x32xf32>
    %cst_10 = arith.constant 9.99999974E-6 : f32
    %27 = vector.broadcast %cst_10 : f32 to vector<16x1xf32>
    %28 = arith.addf %24, %27 : vector<16x1xf32>
    %29 = math.rsqrt %28 : vector<16x1xf32>
    %30 = vector.broadcast %29 : vector<16x1xf32> to vector<16x32xf32>
    %31 = arith.mulf %26, %30 : vector<16x32xf32>
    %32 = vector.broadcast %6 : vector<1x32xf32> to vector<16x32xf32>
    %33 = arith.mulf %31, %32 : vector<16x32xf32>
    %34 = vector.broadcast %7 : vector<1x32xf32> to vector<16x32xf32>
    %35 = arith.addf %33, %34 : vector<16x32xf32>
    %36 = arith.truncf %35 : vector<16x32xf32> to vector<16x32xbf16>
    %c0_11 = arith.constant 0 : index
    %c0_12 = arith.constant 0 : index
    %c0_13 = arith.constant 0 : index
    %c0_14 = arith.constant 0 : index
    %37 = vector.load %arg5[%c0_11, %c0_12, %c0_13, %c0_14] : memref<1x1x32x256xbf16, #tpu.memory_space<vmem>>, vector<1x1x32x256xbf16>
    %38 = vector.shape_cast %37 : vector<1x1x32x256xbf16> to vector<32x256xbf16>
    %cst_15 = arith.constant dense<0.000000e+00> : vector<16x256xf32>
    %39 = tpu.matmul %36, %38, %cst_15 {dimension_numbers = #tpu.dot_dimension_numbers<[1], [0], [0], [1], [0, 0, 1, 1], [], []>} : vector<16x32xbf16>, vector<32x256xbf16>, vector<16x256xf32> -> vector<16x256xf32>
    %40 = vector.broadcast %8 : vector<1x256xf32> to vector<16x256xf32>
    %41 = arith.addf %39, %40 : vector<16x256xf32>
    %42 = arith.mulf %41, %41 : vector<16x256xf32>
    %43 = arith.mulf %41, %42 : vector<16x256xf32>
    %cst_16 = arith.constant 4.471500e-02 : f32
    %44 = vector.broadcast %cst_16 : f32 to vector<16x256xf32>
    %45 = arith.mulf %44, %43 : vector<16x256xf32>
    %46 = arith.addf %41, %45 : vector<16x256xf32>
    %cst_17 = arith.constant 0.797884583 : f32
    %47 = vector.broadcast %cst_17 : f32 to vector<16x256xf32>
    %48 = arith.mulf %47, %46 : vector<16x256xf32>
    %49 = math.tanh %48 : vector<16x256xf32>
    %cst_18 = arith.constant 1.000000e+00 : f32
    %50 = vector.broadcast %cst_18 : f32 to vector<16x256xf32>
    %51 = arith.addf %50, %49 : vector<16x256xf32>
    %cst_19 = arith.constant 5.000000e-01 : f32
    %52 = vector.broadcast %cst_19 : f32 to vector<16x256xf32>
    %53 = arith.mulf %52, %51 : vector<16x256xf32>
    %54 = arith.mulf %41, %53 : vector<16x256xf32>
    %55 = vector.extract_strided_slice %54 {offsets = [0, 0], sizes = [16, 128], strides = [1, 1]} : vector<16x256xf32> to vector<16x128xf32>
    %56 = vector.extract_strided_slice %54 {offsets = [0, 128], sizes = [16, 128], strides = [1, 1]} : vector<16x256xf32> to vector<16x128xf32>
    %cst_20 = arith.constant dense<0.000000e+00> : vector<16xf32>
    %57 = vector.multi_reduction <add>, %56, %cst_20 [1] : vector<16x128xf32> to vector<16xf32>
    %58 = vector.shape_cast %57 : vector<16xf32> to vector<16x1xf32>
    %cst_21 = arith.constant 1.250000e-01 : f32
    %59 = vector.broadcast %cst_21 : f32 to vector<16x1xf32>
    %60 = arith.mulf %58, %59 : vector<16x1xf32>
    %61 = arith.mulf %56, %56 : vector<16x128xf32>
    %cst_22 = arith.constant dense<0.000000e+00> : vector<16xf32>
    %62 = vector.multi_reduction <add>, %61, %cst_22 [1] : vector<16x128xf32> to vector<16xf32>
    %63 = vector.shape_cast %62 : vector<16xf32> to vector<16x1xf32>
    %cst_23 = arith.constant 1.250000e-01 : f32
    %64 = vector.broadcast %cst_23 : f32 to vector<16x1xf32>
    %65 = arith.mulf %63, %64 : vector<16x1xf32>
    %66 = arith.mulf %60, %60 : vector<16x1xf32>
    %67 = arith.subf %65, %66 : vector<16x1xf32>
    %cst_24 = arith.constant 0.000000e+00 : f32
    %68 = vector.broadcast %cst_24 : f32 to vector<16x1xf32>
    %69 = arith.maximumf %67, %68 : vector<16x1xf32>
    %70 = vector.broadcast %60 : vector<16x1xf32> to vector<16x128xf32>
    %71 = arith.subf %56, %70 : vector<16x128xf32>
    %cst_25 = arith.constant 9.99999974E-6 : f32
    %72 = vector.broadcast %cst_25 : f32 to vector<16x1xf32>
    %73 = arith.addf %69, %72 : vector<16x1xf32>
    %74 = math.rsqrt %73 : vector<16x1xf32>
    %75 = vector.broadcast %74 : vector<16x1xf32> to vector<16x128xf32>
    %76 = arith.mulf %71, %75 : vector<16x128xf32>
    %77 = vector.broadcast %9 : vector<1x128xf32> to vector<16x128xf32>
    %78 = arith.mulf %76, %77 : vector<16x128xf32>
    %79 = vector.broadcast %10 : vector<1x128xf32> to vector<16x128xf32>
    %80 = arith.addf %78, %79 : vector<16x128xf32>
    %c0_26 = arith.constant 0 : index
    %c0_27 = arith.constant 0 : index
    %c0_28 = arith.constant 0 : index
    %c0_29 = arith.constant 0 : index
    %81 = vector.load %arg6[%c0_26, %c0_27, %c0_28, %c0_29] : memref<1x1x8x8xbf16, #tpu.memory_space<vmem>>, vector<1x1x8x8xbf16>
    %82 = vector.shape_cast %81 : vector<1x1x8x8xbf16> to vector<8x8xbf16>
    %c0_30 = arith.constant 0 : index
    %c0_31 = arith.constant 0 : index
    %c0_32 = arith.constant 0 : index
    %c0_33 = arith.constant 0 : index
    %83 = vector.load %arg7[%c0_30, %c0_31, %c0_32, %c0_33] : memref<1x1x8x1xf32, #tpu.memory_space<vmem>>, vector<1x1x8x1xf32>
    %84 = vector.shape_cast %83 : vector<1x1x8x1xf32> to vector<8x1xf32>
    %85 = vector.extract_strided_slice %80 {offsets = [0, 0], sizes = [8, 128], strides = [1, 1]} : vector<16x128xf32> to vector<8x128xf32>
    %86 = arith.truncf %85 : vector<8x128xf32> to vector<8x128xbf16>
    %cst_34 = arith.constant dense<0.000000e+00> : vector<8x128xf32>
    %87 = tpu.matmul %82, %86, %cst_34 {dimension_numbers = #tpu.dot_dimension_numbers<[1], [0], [0], [1], [0, 0, 1, 1], [], []>} : vector<8x8xbf16>, vector<8x128xbf16>, vector<8x128xf32> -> vector<8x128xf32>
    %88 = vector.broadcast %84 : vector<8x1xf32> to vector<8x128xf32>
    %89 = arith.addf %87, %88 : vector<8x128xf32>
    %90 = vector.extract_strided_slice %80 {offsets = [8, 0], sizes = [8, 128], strides = [1, 1]} : vector<16x128xf32> to vector<8x128xf32>
    %91 = arith.truncf %90 : vector<8x128xf32> to vector<8x128xbf16>
    %cst_35 = arith.constant dense<0.000000e+00> : vector<8x128xf32>
    %92 = tpu.matmul %82, %91, %cst_35 {dimension_numbers = #tpu.dot_dimension_numbers<[1], [0], [0], [1], [0, 0, 1, 1], [], []>} : vector<8x8xbf16>, vector<8x128xbf16>, vector<8x128xf32> -> vector<8x128xf32>
    %93 = vector.broadcast %84 : vector<8x1xf32> to vector<8x128xf32>
    %94 = arith.addf %92, %93 : vector<8x128xf32>
    %95 = tpu.concatenate %89, %94 in 0 : vector<8x128xf32>, vector<8x128xf32> -> vector<16x128xf32>
    %96 = arith.mulf %55, %95 : vector<16x128xf32>
    %97 = arith.truncf %96 : vector<16x128xf32> to vector<16x128xbf16>
    %c0_36 = arith.constant 0 : index
    %c0_37 = arith.constant 0 : index
    %c0_38 = arith.constant 0 : index
    %c0_39 = arith.constant 0 : index
    %98 = vector.load %arg8[%c0_36, %c0_37, %c0_38, %c0_39] : memref<1x1x128x32xbf16, #tpu.memory_space<vmem>>, vector<1x1x128x32xbf16>
    %99 = vector.shape_cast %98 : vector<1x1x128x32xbf16> to vector<128x32xbf16>
    %cst_40 = arith.constant dense<0.000000e+00> : vector<16x32xf32>
    %100 = tpu.matmul %97, %99, %cst_40 {dimension_numbers = #tpu.dot_dimension_numbers<[1], [0], [0], [1], [0, 0, 1, 1], [], []>} : vector<16x128xbf16>, vector<128x32xbf16>, vector<16x32xf32> -> vector<16x32xf32>
    %101 = vector.broadcast %11 : vector<1x32xf32> to vector<16x32xf32>
    %102 = arith.addf %100, %101 : vector<16x32xf32>
    %103 = arith.addf %3, %102 : vector<16x32xf32>
    %c1_i32 = arith.constant 1 : i32
    %104 = arith.cmpi slt, %arg2, %c1_i32 : i32
    %105 = arith.extui %104 : i1 to i32
    %c0_i32_41 = arith.constant 0 : i32
    %106 = arith.cmpi ne, %105, %c0_i32_41 : i32
    scf.if %106 {
      %c0_44 = arith.constant 0 : index
      %c0_45 = arith.constant 0 : index
      %110 = vector.load %arg11[%c0_44, %c0_45] : memref<16x32xf32, #tpu.memory_space<vmem>>, vector<16x32xf32>
      tpu.vector_store %arg11[%c0_44, %c0_45], %103 {strides = array<i32>} : memref<16x32xf32, #tpu.memory_space<vmem>>, vector<16x32xf32>,
    } else {
    }
    %c1_i32_42 = arith.constant 1 : i32
    %107 = arith.cmpi eq, %arg2, %c1_i32_42 : i32
    %108 = arith.extui %107 : i1 to i32
    %c0_i32_43 = arith.constant 0 : i32
    %109 = arith.cmpi ne, %108, %c0_i32_43 : i32
    scf.if %109 {
      %c0_44 = arith.constant 0 : index
      %c0_45 = arith.constant 0 : index
      %c0_46 = arith.constant 0 : index
      %110 = vector.load %arg9[%c0_44, %c0_45, %c0_46] : memref<1x16x32xf32, #tpu.memory_space<vmem>>, vector<1x16x32xf32>
      %111 = vector.shape_cast %110 : vector<1x16x32xf32> to vector<16x32xf32>
      %112 = vector.shape_cast %103 : vector<16x32xf32> to vector<1x16x32xf32>
      tpu.vector_store %arg9[%c0_44, %c0_45, %c0_46], %112 {strides = array<i32>} : memref<1x16x32xf32, #tpu.memory_space<vmem>>, vector<1x16x32xf32>,
      %113 = vector.extract_strided_slice %103 {offsets = [0, 0], sizes = [8, 32], strides = [1, 1]} : vector<16x32xf32> to vector<8x32xf32>
      %cst_47 = arith.constant dense<0.000000e+00> : vector<32xf32>
      %114 = vector.multi_reduction <add>, %113, %cst_47 [0] : vector<8x32xf32> to vector<32xf32>
      %115 = vector.shape_cast %114 : vector<32xf32> to vector<1x32xf32>
      %cst_48 = arith.constant 8.000000e+00 : f32
      %116 = vector.broadcast %cst_48 : f32 to vector<1x32xf32>
      %117 = arith.divf %115, %116 : vector<1x32xf32>
      %c0_49 = arith.constant 0 : index
      %c0_50 = arith.constant 0 : index
      %c0_51 = arith.constant 0 : index
      %c0_52 = arith.constant 0 : index
      %118 = vector.load %arg10[%c0_49, %c0_50, %c0_51, %c0_52] : memref<1x2x1x32xf32, #tpu.memory_space<vmem>>, vector<1x1x1x32xf32>
      %119 = vector.shape_cast %118 : vector<1x1x1x32xf32> to vector<1x32xf32>
      %120 = vector.shape_cast %117 : vector<1x32xf32> to vector<1x1x1x32xf32>
      tpu.vector_store %arg10[%c0_49, %c0_50, %c0_51, %c0_52], %120 {strides = array<i32>} : memref<1x2x1x32xf32, #tpu.memory_space<vmem>>, vector<1x1x1x32xf32>,
      %121 = vector.extract_strided_slice %103 {offsets = [8, 0], sizes = [8, 32], strides = [1, 1]} : vector<16x32xf32> to vector<8x32xf32>
      %cst_53 = arith.constant dense<0.000000e+00> : vector<32xf32>
      %122 = vector.multi_reduction <add>, %121, %cst_53 [0] : vector<8x32xf32> to vector<32xf32>
      %123 = vector.shape_cast %122 : vector<32xf32> to vector<1x32xf32>
      %cst_54 = arith.constant 8.000000e+00 : f32
      %124 = vector.broadcast %cst_54 : f32 to vector<1x32xf32>
      %125 = arith.divf %123, %124 : vector<1x32xf32>
      %c0_55 = arith.constant 0 : index
      %c1 = arith.constant 1 : index
      %c0_56 = arith.constant 0 : index
      %c0_57 = arith.constant 0 : index
      %126 = vector.load %arg10[%c0_55, %c1, %c0_56, %c0_57] : memref<1x2x1x32xf32, #tpu.memory_space<vmem>>, vector<1x1x1x32xf32>
      %127 = vector.shape_cast %126 : vector<1x1x1x32xf32> to vector<1x32xf32>
      %128 = vector.shape_cast %125 : vector<1x32xf32> to vector<1x1x1x32xf32>
      tpu.vector_store %arg10[%c0_55, %c1, %c0_56, %c0_57], %128 {strides = array<i32>} : memref<1x2x1x32xf32, #tpu.memory_space<vmem>>, vector<1x1x1x32xf32>,
    } else {
    }
    return
  }
  func.func @transform_0(%arg0: i32, %arg1: i32, %arg2: i32) -> (i32, i32) {
    %c0_i32 = arith.constant 0 : i32
    %c0_i32_0 = arith.constant 0 : i32
    return %arg1, %c0_i32 : i32, i32
  }
  func.func @transform_1(%arg0: i32, %arg1: i32, %arg2: i32) -> (i32, i32, i32, i32) {
    %c0_i32 = arith.constant 0 : i32
    %c0_i32_0 = arith.constant 0 : i32
    %c0_i32_1 = arith.constant 0 : i32
    return %arg0, %arg2, %c0_i32, %c0_i32_0 : i32, i32, i32, i32
  }
  func.func @transform_2(%arg0: i32, %arg1: i32, %arg2: i32) -> (i32, i32, i32, i32) {
    %c0_i32 = arith.constant 0 : i32
    %c0_i32_0 = arith.constant 0 : i32
    %c0_i32_1 = arith.constant 0 : i32
    return %arg0, %arg2, %c0_i32, %c0_i32_0 : i32, i32, i32, i32
  }
  func.func @transform_3(%arg0: i32, %arg1: i32, %arg2: i32) -> (i32, i32, i32, i32) {
    %c0_i32 = arith.constant 0 : i32
    %c0_i32_0 = arith.constant 0 : i32
    %c0_i32_1 = arith.constant 0 : i32
    return %arg0, %arg2, %c0_i32, %c0_i32_0 : i32, i32, i32, i32
  }
  func.func @transform_4(%arg0: i32, %arg1: i32, %arg2: i32) -> (i32, i32, i32, i32) {
    %c0_i32 = arith.constant 0 : i32
    %c0_i32_0 = arith.constant 0 : i32
    %c0_i32_1 = arith.constant 0 : i32
    return %arg0, %arg2, %c0_i32, %c0_i32_0 : i32, i32, i32, i32
  }
  func.func @transform_5(%arg0: i32, %arg1: i32, %arg2: i32) -> (i32, i32, i32, i32) {
    %c0_i32 = arith.constant 0 : i32
    %c0_i32_0 = arith.constant 0 : i32
    %c0_i32_1 = arith.constant 0 : i32
    return %arg0, %arg2, %c0_i32, %c0_i32_0 : i32, i32, i32, i32
  }
  func.func @transform_6(%arg0: i32, %arg1: i32, %arg2: i32) -> (i32, i32, i32) {
    %c0_i32 = arith.constant 0 : i32
    %c0_i32_0 = arith.constant 0 : i32
    return %arg0, %arg1, %c0_i32 : i32, i32, i32
  }
  func.func @transform_7(%arg0: i32, %arg1: i32, %arg2: i32) -> (i32, i32, i32, i32) {
    %c0_i32 = arith.constant 0 : i32
    %c0_i32_0 = arith.constant 0 : i32
    %c0_i32_1 = arith.constant 0 : i32
    return %arg0, %arg1, %c0_i32, %c0_i32_0 : i32, i32, i32, i32
  }
}

module attributes {stable_mosaic.version = 11 : i64} {
  func.func @kernel(%arg0: i32, %arg1: memref<8x32xf32, #tpu.memory_space<vmem>>, %arg2: memref<32x128xbf16, #tpu.memory_space<vmem>>, %arg3: memref<128x128xbf16, #tpu.memory_space<vmem>>, %arg4: memref<8x128xf32, #tpu.memory_space<vmem>>) attributes {dimension_semantics = [#tpu.dimension_semantics<parallel>], iteration_bounds = array<i64: 1>, scalar_prefetch = 0 : i64, scratch_operands = 0 : i64, tpu.core_type = #tpu.core_type<tc>, window_params = [{transform_indices = @transform_0, window_bounds = array<i64: 8, 32>}, {pipeline_mode = #tpu.pipeline_mode<synchronous>, transform_indices = @transform_1, window_bounds = array<i64: 32, 128>}, {pipeline_mode = #tpu.pipeline_mode<synchronous>, transform_indices = @transform_2, window_bounds = array<i64: 128, 128>}, {transform_indices = @transform_3, window_bounds = array<i64: 8, 128>}]} {
    %c0 = arith.constant 0 : index
    %c0_0 = arith.constant 0 : index
    %0 = vector.load %arg1[%c0, %c0_0] : memref<8x32xf32, #tpu.memory_space<vmem>>, vector<8x32xf32>
    %1 = arith.truncf %0 : vector<8x32xf32> to vector<8x32xbf16>
    %c0_1 = arith.constant 0 : index
    %c0_2 = arith.constant 0 : index
    %2 = vector.load %arg2[%c0_1, %c0_2] : memref<32x128xbf16, #tpu.memory_space<vmem>>, vector<32x128xbf16>
    %cst = arith.constant dense<0.000000e+00> : vector<8x128xf32>
    %3 = tpu.matmul %1, %2, %cst {dimension_numbers = #tpu.dot_dimension_numbers<[1], [0], [0], [1], [0, 0, 1, 1], [], []>} : vector<8x32xbf16>, vector<32x128xbf16>, vector<8x128xf32> -> vector<8x128xf32>
    %4 = arith.mulf %3, %3 : vector<8x128xf32>
    %cst_3 = arith.constant dense<0.000000e+00> : vector<8xf32>
    %5 = vector.multi_reduction <add>, %4, %cst_3 [1] : vector<8x128xf32> to vector<8xf32>
    %6 = vector.shape_cast %5 : vector<8xf32> to vector<8x1xf32>
    %cst_4 = arith.constant 9.99999996E-13 : f32
    %7 = vector.broadcast %cst_4 : f32 to vector<8x1xf32>
    %8 = arith.addf %6, %7 : vector<8x1xf32>
    %9 = math.rsqrt %8 : vector<8x1xf32>
    %10 = arith.truncf %3 : vector<8x128xf32> to vector<8x128xbf16>
    %c0_5 = arith.constant 0 : index
    %c0_6 = arith.constant 0 : index
    %11 = vector.load %arg3[%c0_5, %c0_6] : memref<128x128xbf16, #tpu.memory_space<vmem>>, vector<128x128xbf16>
    %cst_7 = arith.constant dense<0.000000e+00> : vector<8x128xf32>
    %12 = tpu.matmul %10, %11, %cst_7 {dimension_numbers = #tpu.dot_dimension_numbers<[1], [0], [0], [1], [0, 0, 1, 1], [], []>} : vector<8x128xbf16>, vector<128x128xbf16>, vector<8x128xf32> -> vector<8x128xf32>
    %13 = vector.broadcast %9 : vector<8x1xf32> to vector<8x128xf32>
    %14 = arith.mulf %12, %13 : vector<8x128xf32>
    %cst_8 = arith.constant -1.000000e+00 : f32
    %cst_9 = arith.constant 1.000000e+00 : f32
    %15 = vector.broadcast %cst_8 : f32 to vector<8x128xf32>
    %16 = arith.maximumf %15, %14 : vector<8x128xf32>
    %17 = vector.broadcast %cst_9 : f32 to vector<8x128xf32>
    %18 = arith.minimumf %17, %16 : vector<8x128xf32>
    %c0_10 = arith.constant 0 : index
    %c0_11 = arith.constant 0 : index
    %19 = vector.load %arg4[%c0_10, %c0_11] : memref<8x128xf32, #tpu.memory_space<vmem>>, vector<8x128xf32>
    tpu.vector_store %arg4[%c0_10, %c0_11], %18 {strides = array<i32>} : memref<8x128xf32, #tpu.memory_space<vmem>>, vector<8x128xf32>,
    return
  }
  func.func @transform_0(%arg0: i32) -> (i32, i32) {
    %c0_i32 = arith.constant 0 : i32
    %c0_i32_0 = arith.constant 0 : i32
    return %arg0, %c0_i32 : i32, i32
  }
  func.func @transform_1(%arg0: i32) -> (i32, i32) {
    %c0_i32 = arith.constant 0 : i32
    %c0_i32_0 = arith.constant 0 : i32
    %c0_i32_1 = arith.constant 0 : i32
    return %c0_i32, %c0_i32_0 : i32, i32
  }
  func.func @transform_2(%arg0: i32) -> (i32, i32) {
    %c0_i32 = arith.constant 0 : i32
    %c0_i32_0 = arith.constant 0 : i32
    %c0_i32_1 = arith.constant 0 : i32
    return %c0_i32, %c0_i32_0 : i32, i32
  }
  func.func @transform_3(%arg0: i32) -> (i32, i32) {
    %c0_i32 = arith.constant 0 : i32
    %c0_i32_0 = arith.constant 0 : i32
    return %arg0, %c0_i32 : i32, i32
  }
}

module attributes {stable_mosaic.version = 11 : i64} {
  func.func @kernel(%arg0: i32, %arg1: memref<16x32xf32, #tpu.memory_space<vmem>>, %arg2: memref<32x128xbf16, #tpu.memory_space<vmem>>, %arg3: memref<128x128xbf16, #tpu.memory_space<vmem>>, %arg4: memref<16x128xf32, #tpu.memory_space<vmem>>) attributes {dimension_semantics = [#tpu.dimension_semantics<parallel>], iteration_bounds = array<i64: 1>, scalar_prefetch = 0 : i64, scratch_operands = 0 : i64, tpu.core_type = #tpu.core_type<tc>, window_params = [{transform_indices = @transform_0, window_bounds = array<i64: 16, 32>}, {pipeline_mode = #tpu.pipeline_mode<synchronous>, transform_indices = @transform_1, window_bounds = array<i64: 32, 128>}, {pipeline_mode = #tpu.pipeline_mode<synchronous>, transform_indices = @transform_2, window_bounds = array<i64: 128, 128>}, {transform_indices = @transform_3, window_bounds = array<i64: 16, 128>}]} {
    %c0 = arith.constant 0 : index
    %c0_0 = arith.constant 0 : index
    %0 = vector.load %arg1[%c0, %c0_0] : memref<16x32xf32, #tpu.memory_space<vmem>>, vector<16x32xf32>
    %1 = arith.truncf %0 : vector<16x32xf32> to vector<16x32xbf16>
    %c0_1 = arith.constant 0 : index
    %c0_2 = arith.constant 0 : index
    %2 = vector.load %arg2[%c0_1, %c0_2] : memref<32x128xbf16, #tpu.memory_space<vmem>>, vector<32x128xbf16>
    %cst = arith.constant dense<0.000000e+00> : vector<16x128xf32>
    %3 = tpu.matmul %1, %2, %cst {dimension_numbers = #tpu.dot_dimension_numbers<[1], [0], [0], [1], [0, 0, 1, 1], [], []>} : vector<16x32xbf16>, vector<32x128xbf16>, vector<16x128xf32> -> vector<16x128xf32>
    %4 = arith.mulf %3, %3 : vector<16x128xf32>
    %cst_3 = arith.constant dense<0.000000e+00> : vector<16xf32>
    %5 = vector.multi_reduction <add>, %4, %cst_3 [1] : vector<16x128xf32> to vector<16xf32>
    %6 = vector.shape_cast %5 : vector<16xf32> to vector<16x1xf32>
    %cst_4 = arith.constant 9.99999996E-13 : f32
    %7 = vector.broadcast %cst_4 : f32 to vector<16x1xf32>
    %8 = arith.addf %6, %7 : vector<16x1xf32>
    %9 = math.rsqrt %8 : vector<16x1xf32>
    %10 = arith.truncf %3 : vector<16x128xf32> to vector<16x128xbf16>
    %c0_5 = arith.constant 0 : index
    %c0_6 = arith.constant 0 : index
    %11 = vector.load %arg3[%c0_5, %c0_6] : memref<128x128xbf16, #tpu.memory_space<vmem>>, vector<128x128xbf16>
    %cst_7 = arith.constant dense<0.000000e+00> : vector<16x128xf32>
    %12 = tpu.matmul %10, %11, %cst_7 {dimension_numbers = #tpu.dot_dimension_numbers<[1], [0], [0], [1], [0, 0, 1, 1], [], []>} : vector<16x128xbf16>, vector<128x128xbf16>, vector<16x128xf32> -> vector<16x128xf32>
    %13 = vector.broadcast %9 : vector<16x1xf32> to vector<16x128xf32>
    %14 = arith.mulf %12, %13 : vector<16x128xf32>
    %cst_8 = arith.constant -1.000000e+00 : f32
    %cst_9 = arith.constant 1.000000e+00 : f32
    %15 = vector.broadcast %cst_8 : f32 to vector<16x128xf32>
    %16 = arith.maximumf %15, %14 : vector<16x128xf32>
    %17 = vector.broadcast %cst_9 : f32 to vector<16x128xf32>
    %18 = arith.minimumf %17, %16 : vector<16x128xf32>
    %c0_10 = arith.constant 0 : index
    %c0_11 = arith.constant 0 : index
    %19 = vector.load %arg4[%c0_10, %c0_11] : memref<16x128xf32, #tpu.memory_space<vmem>>, vector<16x128xf32>
    tpu.vector_store %arg4[%c0_10, %c0_11], %18 {strides = array<i32>} : memref<16x128xf32, #tpu.memory_space<vmem>>, vector<16x128xf32>,
    return
  }
  func.func @transform_0(%arg0: i32) -> (i32, i32) {
    %c0_i32 = arith.constant 0 : i32
    %c0_i32_0 = arith.constant 0 : i32
    return %arg0, %c0_i32 : i32, i32
  }
  func.func @transform_1(%arg0: i32) -> (i32, i32) {
    %c0_i32 = arith.constant 0 : i32
    %c0_i32_0 = arith.constant 0 : i32
    %c0_i32_1 = arith.constant 0 : i32
    return %c0_i32, %c0_i32_0 : i32, i32
  }
  func.func @transform_2(%arg0: i32) -> (i32, i32) {
    %c0_i32 = arith.constant 0 : i32
    %c0_i32_0 = arith.constant 0 : i32
    %c0_i32_1 = arith.constant 0 : i32
    return %c0_i32, %c0_i32_0 : i32, i32
  }
  func.func @transform_3(%arg0: i32) -> (i32, i32) {
    %c0_i32 = arith.constant 0 : i32
    %c0_i32_0 = arith.constant 0 : i32
    return %arg0, %c0_i32 : i32, i32
  }
}

</mosaic_0001>

<llo_original>
// kernel: multireso_forward.4
$region0: #{multireso_forward.4}
  #allocation0 [shape = 'u32[]', space=smem, size = 0x4, offset = 0x4, fixed_abs, tag = 'smem constant byte address 0x4 - core index']
  #allocation1 [shape = 'u32[144,128]{1,0:T(1,128)}', space=vmem, size = 0x12000, scoped, tag = 'internal scratch']
  %s0 = inlined_call_operand.vmem [shape: f32[6], index: 0, kind: input, shape index: {}]
  %s1 = inlined_call_operand.vmem [shape: f32[6,2,8,32], index: 1, kind: input, shape index: {}]
  %s2 = inlined_call_operand.vmem [shape: f32[2,8,32], index: 2, kind: output, shape index: {}]
  %s3 = sld [smem:[#allocation0]]
  $region91: #{multireso_forward.4} parent=0
    _
  %s5 = ssub.s32 1, %s3
  %s6 = scalar_select 0, %s5, %s3
  $region1: #{multireso_forward.4} parent=0
    #allocation2 [shape = 'u8[512]{0}', space=smem, size = 0x200, scoped, tag = 'input window, operand 0, single buffered']
    #allocation3 [shape = 's32[2]{0}', space=sflag, size = 0x8, scoped, tag = 'scoped memory for multireso_forward.4']
    #allocation4 [shape = 'u8[49152]{0}', space=vmem, size = 0xc000, scoped, tag = 'input window, operand 1']
    %7 = vsyncpa [#allocation3], 0
    loop: start=0, step=1, limit=4
    $region2: #{multireso_forward.4} parent=1 // loop_pre_header
      _
    $region3: #{multireso_forward.4} parent=1 // loop_header
      %s9 = sphi 0, %s13
      %p10 = scmp.ge.s32.totalorder %s9, 4
      %s16 = sphi 0, %s28
      %s17 = sphi 0, %s24
      %s18 = sphi 0, %s16
      %s19 = sphi 0, %s17
      %s20 = sphi 0, %s18
      %s21 = sphi 0, %s19
      %s29 = sphi 0, %s29
      %s31 = sphi 0, %s29
      %s32 = sphi 0, %s31
      %s46 = sphi 0, %s32
      %s54 = sphi 0, %s56
      %s57 = sphi 0, %s54
      %s58 = sphi 0, %s57
      %s74 = sphi 0, %s58
      %s80 = sphi 0, %s82
      %s83 = sphi 0, %s80
      %s84 = sphi 0, %s83
      %s100 = sphi 0, %s84
    $region4: #{multireso_forward.4} parent=1 // loop_header_branch
      %12 = sbr.rel (%p10) target = $region8
    $region5: #{multireso_forward.4} parent=1 // loop_body
      %s14 = ssub.s32 %s9, 1
      %s15 = ssub.s32 %s9, 2
      %s22 = sadd.s32 1, %s17
      %p23 = scmp.ge.s32.totalorder %s22, 1
      %s24 = scalar_select %p23, 0, %s22
      %s25 = sadd.s32 1, %s16
      %s26 = scalar_select %p23, %s25, %s16
      %p27 = scmp.ge.s32.totalorder %s26, 2
      %s28 = scalar_select %p27, 0, %s26
      %s30 = sadd.s32 %s29, 1
      %p33 = scmp.eq.s32.totalorder %s9, 1
      %p34 = scmp.ne.s32.totalorder %s29, %s31
      %p35 = scmp.eq.s32.totalorder %s9, 0
      %p36 = por %p34, %p35
      %p37 = scmp.ne.s32.totalorder %s29, %s31
      %p38 = scmp.eq.s32.totalorder %s14, 1
      %p39 = por %p37, %p38
      %p40 = scmp.ne.s32.totalorder %s31, %s32
      %p41 = scmp.eq.s32.totalorder %s14, 0
      %p42 = por %p40, %p41
      %p43 = scmp.ne.s32.totalorder %s31, %s32
      %p44 = scmp.eq.s32.totalorder %s15, 1
      %p45 = por %p43, %p44
      %p47 = scmp.ne.s32.totalorder %s32, %s46
      %p48 = scmp.eq.s32.totalorder %s15, 0
      %p49 = por %p47, %p48
      %s50 = ssub.s32 %s17, %s24
      %s51 = ssub.s32 %s16, %s28
      %s52 = sor.u32 %s50, %s51
      %p53 = scmp.eq.s32.totalorder %s52, 0
      %s55 = sadd.s32 %s54, 1
      %s56 = scalar_select %p53, %s54, %s55
      %p59 = pneg %p53
      %p60 = scmp.eq.s32.totalorder %s9, 1
      %p61 = por %p59, %p60
      %p62 = scmp.ne.s32.totalorder %s54, %s57
      %p63 = scmp.eq.s32.totalorder %s9, 0
      %p64 = por %p62, %p63
      %p65 = scmp.ne.s32.totalorder %s54, %s57
      %p66 = scmp.eq.s32.totalorder %s14, 1
      %p67 = por %p65, %p66
      %p68 = scmp.ne.s32.totalorder %s57, %s58
      %p69 = scmp.eq.s32.totalorder %s14, 0
      %p70 = por %p68, %p69
      %p71 = scmp.ne.s32.totalorder %s57, %s58
      %p72 = scmp.eq.s32.totalorder %s15, 1
      %p73 = por %p71, %p72
      %p75 = scmp.ne.s32.totalorder %s58, %s74
      %p76 = scmp.eq.s32.totalorder %s15, 0
      %p77 = por %p75, %p76
      %s78 = ssub.s32 %s16, %s28
      %p79 = scmp.eq.s32.totalorder %s78, 0
      %s81 = sadd.s32 %s80, 1
      %s82 = scalar_select %p79, %s80, %s81
      %p85 = pneg %p79
      %p86 = scmp.eq.s32.totalorder %s9, 1
      %p87 = por %p85, %p86
      %p88 = scmp.ne.s32.totalorder %s80, %s83
      %p89 = scmp.eq.s32.totalorder %s9, 0
      %p90 = por %p88, %p89
      %p91 = scmp.ne.s32.totalorder %s80, %s83
      %p92 = scmp.eq.s32.totalorder %s14, 1
      %p93 = por %p91, %p92
      %p94 = scmp.ne.s32.totalorder %s83, %s84
      %p95 = scmp.eq.s32.totalorder %s14, 0
      %p96 = por %p94, %p95
      %p97 = scmp.ne.s32.totalorder %s83, %s84
      %p98 = scmp.eq.s32.totalorder %s15, 1
      %p99 = por %p97, %p98
      %p101 = scmp.ne.s32.totalorder %s84, %s100
      %p102 = scmp.eq.s32.totalorder %s15, 0
      %p103 = por %p101, %p102
      %p104 = scmp.le.s32.totalorder 1, %s9
      %p105 = scmp.lt.s32.totalorder %s9, 3
      %p106 = pnand %p104, %p105
      %p107 = pneg %p106
      // Predicated region
      $region9: #{multireso_forward.4} parent=5 // pred_check
        _
      $region10: #{multireso_forward.4} parent=5 // pred_check_branch
        %109 = sbr.rel (%p106) target = $region12
      $region11: #{multireso_forward.4} parent=5 // pred_region
        %s110 = ssub.s32 %s9, 1
        // Predicated region
        $region13: #{multireso_forward.4} parent=11 // pred_check
          %p111 = pneg %p42
        $region14: #{multireso_forward.4} parent=11 // pred_check_branch
          %113 = sbr.rel (%p111) target = $region16
        $region15: #{multireso_forward.4} parent=11 // pred_region
          %s115 = ssub.s32 16, 16
          %116 = vsyncadd [#allocation3], %s115
          %s118 = sshll.u32 %s0, 4
          %s119 = int_to_ptr.vmem [resolvable:$true] %s118
          %121 = dma.vmem_to_smem %s119, 16, [#allocation2], [#allocation3]
        $region16: #{multireso_forward.4} parent=11 // pred_fallthru
          _
      $region12: #{multireso_forward.4} parent=5 // pred_fallthru
        _
      %p122 = scmp.lt.s32.totalorder %s9, 2
      // Predicated region
      $region17: #{multireso_forward.4} parent=5 // pred_check
        %p123 = pneg %p122
      $region18: #{multireso_forward.4} parent=5 // pred_check_branch
        %125 = sbr.rel (%p123) target = $region20
      $region19: #{multireso_forward.4} parent=5 // pred_region
        // Predicated region
        $region21: #{multireso_forward.4} parent=19 // pred_check
          %p126 = pneg %p64
        $region22: #{multireso_forward.4} parent=19 // pred_check_branch
          %128 = sbr.rel (%p126) target = $region24
        $region23: #{multireso_forward.4} parent=19 // pred_region
          %s129 = sand.u32 %s54, 1
          %s130 = sand.u32 %s54, 1
          %s131 = smul.addr %s130, 48
          %s132 = scalar_lea.vmem [#allocation4], %s131
          %s133 = smul.u32 6, %s17
          %s134 = smul.addr %s133, 2
          %s135 = sadd.s32 %s16, %s134
          %s136 = smul.addr %s135, 8
          %s137 = scalar_lea.vmem %s1, %s136
          // Predicated region
          $region25: #{multireso_forward.4} parent=23 // pred_check
            _
          $region26: #{multireso_forward.4} parent=23 // pred_check_branch
            %139 = sbr.rel (0) target = $region28
          $region27: #{multireso_forward.4} parent=23 // pred_region
            // Predicated region
            $region29: #{multireso_forward.4} parent=27 // pred_check
              _
            $region30: #{multireso_forward.4} parent=27 // pred_check_branch
              %141 = sbr.rel (0) target = $region32
            $region31: #{multireso_forward.4} parent=27 // pred_region
              // Predicated region
              $region44: #{multireso_forward.4} parent=31 // pred_check
                _
              $region45: #{multireso_forward.4} parent=31 // pred_check_branch
                %166 = sbr.rel (0) target = $region47
              $region46: #{multireso_forward.4} parent=31 // pred_region
                loop: start=0, step=1, limit=1
                $region48: #{multireso_forward.4} parent=46 // loop_pre_header
                  _
                $region49: #{multireso_forward.4} parent=46 // loop_header
                  %s168 = sphi 0, %s172
                  %p169 = scmp.ge.s32.totalorder %s168, 1
                  %s173 = sphi %s137, %s137
                  %s174 = sphi %s132, %s132
                $region50: #{multireso_forward.4} parent=46 // loop_header_branch
                  %171 = sbr.rel (%p169) target = $region54
                $region51: #{multireso_forward.4} parent=46 // loop_body
                  %v175 = vld [vmem:[%s173] sm:$0xff]
                  %176 = vst [vmem:[%s174] sm:$0xff] %v175
                  %v177 = vld [vmem:[%s173 + $0x10] sm:$0xff]
                  %178 = vst [vmem:[%s174 + $0x8] sm:$0xff] %v177
                  %v179 = vld [vmem:[%s173 + $0x20] sm:$0xff]
                  %180 = vst [vmem:[%s174 + $0x10] sm:$0xff] %v179
                  %v181 = vld [vmem:[%s173 + $0x30] sm:$0xff]
                  %182 = vst [vmem:[%s174 + $0x18] sm:$0xff] %v181
                  %v183 = vld [vmem:[%s173 + $0x40] sm:$0xff]
                  %184 = vst [vmem:[%s174 + $0x20] sm:$0xff] %v183
                  %v185 = vld [vmem:[%s173 + $0x50] sm:$0xff]
                  %186 = vst [vmem:[%s174 + $0x28] sm:$0xff] %v185
                $region52: #{multireso_forward.4} parent=46 // loop_footer
                  %s172 = sadd.s32 1, %s168
                $region53: #{multireso_forward.4} parent=46 // loop_footer_branch
                  %167 = sbr.rel target = $region49
                $region54: #{multireso_forward.4} parent=46 // loop_exit
                  _
              $region47: #{multireso_forward.4} parent=31 // pred_fallthru
                _
              // Predicated region
              $region55: #{multireso_forward.4} parent=31 // pred_check
                _
              $region56: #{multireso_forward.4} parent=31 // pred_check_branch
                %188 = sbr.rel target = $region58
              $region57: #{multireso_forward.4} parent=31 // pred_region
                _
              $region58: #{multireso_forward.4} parent=31 // pred_fallthru
                _
            $region32: #{multireso_forward.4} parent=27 // pred_fallthru
              _
            // Predicated region
            $region33: #{multireso_forward.4} parent=27 // pred_check
              _
            $region34: #{multireso_forward.4} parent=27 // pred_check_branch
              %143 = sbr.rel target = $region36
            $region35: #{multireso_forward.4} parent=27 // pred_region
              loop: start=0, step=1, limit=1
              $region37: #{multireso_forward.4} parent=35 // loop_pre_header
                _
              $region38: #{multireso_forward.4} parent=35 // loop_header
                %s146 = sphi 0, %s150
                %p147 = scmp.ge.s32.totalorder %s146, 1
                %s151 = sphi %s137, %s137
                %s152 = sphi %s132, %s132
              $region39: #{multireso_forward.4} parent=35 // loop_header_branch
                %149 = sbr.rel (%p147) target = $region43
              $region40: #{multireso_forward.4} parent=35 // loop_body
                %v153 = vld [vmem:[%s151] sm:$0xff]
                %154 = vst [vmem:[%s152] sm:$0xff] %v153
                %v155 = vld [vmem:[%s151 + $0x10] sm:$0xff]
                %156 = vst [vmem:[%s152 + $0x8] sm:$0xff] %v155
                %v157 = vld [vmem:[%s151 + $0x20] sm:$0xff]
                %158 = vst [vmem:[%s152 + $0x10] sm:$0xff] %v157
                %v159 = vld [vmem:[%s151 + $0x30] sm:$0xff]
                %160 = vst [vmem:[%s152 + $0x18] sm:$0xff] %v159
                %v161 = vld [vmem:[%s151 + $0x40] sm:$0xff]
                %162 = vst [vmem:[%s152 + $0x20] sm:$0xff] %v161
                %v163 = vld [vmem:[%s151 + $0x50] sm:$0xff]
                %164 = vst [vmem:[%s152 + $0x28] sm:$0xff] %v163
              $region41: #{multireso_forward.4} parent=35 // loop_footer
                %s150 = sadd.s32 1, %s146
              $region42: #{multireso_forward.4} parent=35 // loop_footer_branch
                %145 = sbr.rel target = $region38
              $region43: #{multireso_forward.4} parent=35 // loop_exit
                _
            $region36: #{multireso_forward.4} parent=27 // pred_fallthru
              _
          $region28: #{multireso_forward.4} parent=23 // pred_fallthru
            _
          %189 = vnop
        $region24: #{multireso_forward.4} parent=19 // pred_fallthru
          _
      $region20: #{multireso_forward.4} parent=5 // pred_fallthru
        _
      %p190 = scmp.le.s32.totalorder 1, %s9
      %p191 = scmp.lt.s32.totalorder %s9, 3
      %p192 = pnand %p190, %p191
      %p193 = pneg %p192
      // Predicated region
      $region59: #{multireso_forward.4} parent=5 // pred_check
        _
      $region60: #{multireso_forward.4} parent=5 // pred_check_branch
        %195 = sbr.rel (%p192) target = $region62
      $region61: #{multireso_forward.4} parent=5 // pred_region
        %s196 = ssub.s32 %s9, 1
        // Predicated region
        $region63: #{multireso_forward.4} parent=61 // pred_check
          %p197 = pneg %p42
        $region64: #{multireso_forward.4} parent=61 // pred_check_branch
          %199 = sbr.rel (%p197) target = $region66
        $region65: #{multireso_forward.4} parent=61 // pred_region
          %200 = dma.done [#allocation3], 16
        $region66: #{multireso_forward.4} parent=61 // pred_fallthru
          _
        %s201 = sand.u32 %s57, 1
        %s202 = sand.u32 %s57, 1
        %s203 = smul.addr %s202, 48
        %s204 = scalar_lea.vmem [#allocation4], %s203
        // Predicated region
        $region67: #{multireso_forward.4} parent=61 // pred_check
          %p205 = pneg %p70
        $region68: #{multireso_forward.4} parent=61 // pred_check_branch
          %207 = sbr.rel (%p205) target = $region70
        $region69: #{multireso_forward.4} parent=61 // pred_region
          _
        $region70: #{multireso_forward.4} parent=61 // pred_fallthru
          _
        %208 = sfence
        %p209 = pneg %p42
        %p210 = pneg %p39
        %s211 = sand.u32 %s57, 1
        %s212 = sand.u32 %s57, 1
        %s213 = smul.addr %s212, 48
        %s214 = scalar_lea.vmem [#allocation4], %s213
        %p215 = pneg %p70
        %p216 = pneg %p67
        %p217 = pneg %p96
        %p218 = pneg %p93
        %p219 = scmp.lt.s32.totalorder %s18, 1
        %s220 = scalar_select %p219, %s18, 1
        %s221 = smul.addr %s220, 8
        %s222 = scalar_lea.vmem %s2, %s221
        %s223 = smul.u32 6, %s19
        %p224 = scmp.lt.s32.totalorder %s18, 1
        %s225 = scalar_select %p224, %s18, 1
        %s226 = smul.addr %s225, 8
        %s227 = scalar_lea.vmem %s2, %s226
        %s228 = smul.u32 %s19, 6
        %s229 = sld [smem:[#allocation2 + %s228]]
        %v230 = vld [vmem:[%s204] sm:$0xff]
        %v231 = vstv %s229
        %v232 = vmul.f32 %v231, %v230
        %s233 = sadd.s32 %s228, 1
        %s234 = sld [smem:[#allocation2 + %s233]]
        %s235 = scalar_lea.vmem %s204, 8 [#allocation4]
        %v236 = vld [vmem:[%s235] sm:$0xff]
        %v237 = vstv %s234
        %v238 = vmul.f32 %v237, %v236
        %v239 = vadd.f32 %v232, %v238
        %s240 = sadd.s32 %s228, 2
        %s241 = sld [smem:[#allocation2 + %s240]]
        %s242 = scalar_lea.vmem %s204, 16 [#allocation4]
        %v243 = vld [vmem:[%s242] sm:$0xff]
        %v244 = vstv %s241
        %v245 = vmul.f32 %v244, %v243
        %v246 = vadd.f32 %v239, %v245
        %s247 = sadd.s32 %s228, 3
        %s248 = sld [smem:[#allocation2 + %s247]]
        %s249 = scalar_lea.vmem %s204, 24 [#allocation4]
        %v250 = vld [vmem:[%s249] sm:$0xff]
        %v251 = vstv %s248
        %v252 = vmul.f32 %v251, %v250
        %v253 = vadd.f32 %v246, %v252
        %s254 = sadd.s32 %s228, 4
        %s255 = sld [smem:[#allocation2 + %s254]]
        %s256 = scalar_lea.vmem %s204, 32 [#allocation4]
        %v257 = vld [vmem:[%s256] sm:$0xff]
        %v258 = vstv %s255
        %v259 = vmul.f32 %v258, %v257
        %v260 = vadd.f32 %v253, %v259
        %s261 = sadd.s32 %s228, 5
        %s262 = sld [smem:[#allocation2 + %s261]]
        %s263 = scalar_lea.vmem %s204, 40 [#allocation4]
        %v264 = vld [vmem:[%s263] sm:$0xff]
        %v265 = vstv %s262
        %v266 = vmul.f32 %v265, %v264
        %v267 = vadd.f32 %v260, %v266
        %p268 = scmp.eq.s32.totalorder %s19, 0
        // Predicated region
        $region71: #{multireso_forward.4} parent=61 // pred_check
          %p269 = pneg %p268
        $region72: #{multireso_forward.4} parent=61 // pred_check_branch
          %271 = sbr.rel (%p269) target = $region74
        $region73: #{multireso_forward.4} parent=61 // pred_region
          %vm272 = vcmask 261120
          %273 = vst.msk [vmem:[%s227] sm:$0xff] %vm272, %v267
        $region74: #{multireso_forward.4} parent=61 // pred_fallthru
          _
        %p274 = scmp.gt.s32.totalorder %s19, 0
        // Predicated region
        $region75: #{multireso_forward.4} parent=61 // pred_check
          %p275 = pneg %p274
        $region76: #{multireso_forward.4} parent=61 // pred_check_branch
          %277 = sbr.rel (%p275) target = $region78
        $region77: #{multireso_forward.4} parent=61 // pred_region
          %v278 = vld [vmem:[%s227] sm:$0xff]
          %v279 = vadd.f32 %v278, %v267
          %vm280 = vcmask 261120
          %281 = vst.msk [vmem:[%s227] sm:$0xff] %vm280, %v279
        $region78: #{multireso_forward.4} parent=61 // pred_fallthru
          _
        %p282 = scmp.lt.s32.totalorder %s18, 1
        %s283 = scalar_select %p282, %s18, 1
        %s284 = smul.addr %s283, 8
        %s285 = scalar_lea.vmem %s2, %s284
        // Predicated region
        $region79: #{multireso_forward.4} parent=61 // pred_check
          %p286 = pneg %p93
        $region80: #{multireso_forward.4} parent=61 // pred_check_branch
          %288 = sbr.rel (%p286) target = $region82
        $region81: #{multireso_forward.4} parent=61 // pred_region
          _
        $region82: #{multireso_forward.4} parent=61 // pred_fallthru
          _
      $region62: #{multireso_forward.4} parent=5 // pred_fallthru
        _
      %p289 = scmp.le.s32.totalorder 2, %s9
      // Predicated region
      $region83: #{multireso_forward.4} parent=5 // pred_check
        %p290 = pneg %p289
      $region84: #{multireso_forward.4} parent=5 // pred_check_branch
        %292 = sbr.rel (%p290) target = $region86
      $region85: #{multireso_forward.4} parent=5 // pred_region
        %s293 = ssub.s32 %s9, 2
        // Predicated region
        $region87: #{multireso_forward.4} parent=85 // pred_check
          %p294 = pneg %p99
        $region88: #{multireso_forward.4} parent=85 // pred_check_branch
          %296 = sbr.rel (%p294) target = $region90
        $region89: #{multireso_forward.4} parent=85 // pred_region
          %p297 = scmp.lt.s32.totalorder %s20, 1
          %s298 = scalar_select %p297, %s20, 1
          %s299 = smul.addr %s298, 8
          %s300 = scalar_lea.vmem %s2, %s299
        $region90: #{multireso_forward.4} parent=85 // pred_fallthru
          _
      $region86: #{multireso_forward.4} parent=5 // pred_fallthru
        _
    $region6: #{multireso_forward.4} parent=1 // loop_footer
      %s13 = sadd.s32 1, %s9
    $region7: #{multireso_forward.4} parent=1 // loop_footer_branch
      %8 = sbr.rel target = $region3
    $region8: #{multireso_forward.4} parent=1 // loop_exit
      _
    %301 = vsyncpa [#allocation3], 1
    %s302 = scalar_lea.sflag [#allocation3], 1
    %303 = vsyncpa %s302, 1

// kernel: multireso_forward.7
$region0: #{multireso_forward.7}
  #allocation0 [shape = 'u32[]', space=smem, size = 0x4, offset = 0x4, fixed_abs, tag = 'smem constant byte address 0x4 - core index']
  #allocation1 [shape = 'u32[144,128]{1,0:T(1,128)}', space=vmem, size = 0x12000, scoped, tag = 'internal scratch']
  %s0 = inlined_call_operand.vmem [shape: f32[8,32], index: 0, kind: input, shape index: {}]
  %s1 = inlined_call_operand.vmem [shape: bf16[32,128], index: 1, kind: input, shape index: {}]
  %s2 = inlined_call_operand.vmem [shape: bf16[128,128], index: 2, kind: input, shape index: {}]
  %s3 = inlined_call_operand.vmem [shape: f32[8,128], index: 3, kind: output, shape index: {}]
  %s4 = sld [smem:[#allocation0]]
  $region22: #{multireso_forward.7} parent=0
    _
  %s6 = ssub.s32 1, %s4
  %s7 = scalar_select 0, %s6, %s4
  // Predicated region
  $region2: #{multireso_forward.7} parent=0 // pred_check
    _
  $region3: #{multireso_forward.7} parent=0 // pred_check_branch
    %9 = sbr.rel (0) target = $region5
  $region4: #{multireso_forward.7} parent=0 // pred_region
    _
  $region5: #{multireso_forward.7} parent=0 // pred_fallthru
    _
  // Predicated region
  $region6: #{multireso_forward.7} parent=0 // pred_check
    _
  $region7: #{multireso_forward.7} parent=0 // pred_check_branch
    %11 = sbr.rel (0) target = $region9
  $region8: #{multireso_forward.7} parent=0 // pred_region
    _
  $region9: #{multireso_forward.7} parent=0 // pred_fallthru
    _
  // Predicated region
  $region10: #{multireso_forward.7} parent=0 // pred_check
    _
  $region11: #{multireso_forward.7} parent=0 // pred_check_branch
    %13 = sbr.rel (0) target = $region13
  $region12: #{multireso_forward.7} parent=0 // pred_region
    _
  $region13: #{multireso_forward.7} parent=0 // pred_fallthru
    _
  %v15 = vld [vmem:[%s0] sm:$0xff]
  %v16 = vpack.c.bf16 %v15, %v15
  %v17 = vld [vmem:[%s1] sm:$0xf]
  %v18 = vld [vmem:[%s1 + $0x4] sm:$0xf]
  %v19 = vld [vmem:[%s1 + $0x8] sm:$0xf]
  %v20 = vld [vmem:[%s1 + $0xc] sm:$0xf]
  %v25 = vunpack.c.l.b16 %v17
  %v26 = vunpack.c.l.b16 %v18
  %v27 = vunpack.c.l.b16 %v19
  %v28 = vunpack.c.l.b16 %v20
  %v29 = vpack.c.b16 %v26, %v25
  %v30 = vpack.c.b16 %v28, %v27
  %vm33 = vcmask 261120
  %v35 = vsel %vm33, %v16, 0
  %37 = vmatprep.subr.bf16.mxu0 0
  %38 = vmatpush1.bf16.msra.mxu0 %v29
  %39 = vmatprep.subr.bf16.mxu0 0
  %40 = vmatpush1.bf16.msra.mxu0 %v30
  %41 = vmatprep.subr.bf16.mxu0 0
  %42 = vmatpush1.bf16.msra.mxu0 0
  %43 = vmatprep.subr.bf16.mxu0 0
  %44 = vmatpush1.bf16.msra.mxu0 0
  %45 = vmatprep.subr.bf16.mxu0 0
  %46 = vmatpush1.bf16.msra.mxu0 0
  %47 = vmatprep.subr.bf16.mxu0 0
  %48 = vmatpush1.bf16.msra.mxu0 0
  %49 = vmatprep.subr.bf16.mxu0 0
  %50 = vmatpush1.bf16.msra.mxu0 0
  %51 = vmatprep.subr.bf16.mxu0 0
  %52 = vmatpush1.bf16.msra.mxu0 0
  %53 = vmatprep.subr.bf16.mxu0 0
  %54 = vmatpush1.bf16.msra.mxu0 0
  %55 = vmatprep.subr.bf16.mxu0 0
  %56 = vmatpush1.bf16.msra.mxu0 0
  %57 = vmatprep.subr.bf16.mxu0 0
  %58 = vmatpush1.bf16.msra.mxu0 0
  %59 = vmatprep.subr.bf16.mxu0 0
  %60 = vmatpush1.bf16.msra.mxu0 0
  %61 = vmatprep.subr.bf16.mxu0 0
  %62 = vmatpush1.bf16.msra.mxu0 0
  %63 = vmatprep.subr.bf16.mxu0 0
  %64 = vmatpush1.bf16.msra.mxu0 0
  %65 = vmatprep.subr.bf16.mxu0 0
  %66 = vmatpush1.bf16.msra.mxu0 0
  %67 = vmatprep.subr.bf16.mxu0 0
  %68 = vmatpush1.bf16.msra.mxu0 0
  %69 = vmatprep.mubr.bf16.mxu0 0
  %70 = vmatmul.mubr.bf16.gmra.mrb[0].mxu0 %v35
  %v71 = vpop.f32.mrb[0].mxu0
  %v72 = vadd.f32 0.0, %v71
  %v73 = vpop.f32.mrb[0].mxu0
  %v74 = vpop.f32.mrb[0].mxu0
  %v75 = vpop.f32.mrb[0].mxu0
  %76 = vdwg.mxu0
  %v77 = vmul.f32 %v72, %v72
  %78 = vadd.xlane.f32.xlu0 %v77
  %v79 = vpop.xlane.xlu0 %78
  %v80 = vadd.f32 %v79, 1e-12
  %v81 = vrsqrt.pop %v80
  %v82 = vpack.c.bf16 %v72, %v72
  %v83 = vld [vmem:[%s2] sm:$0xf]
  %v84 = vld [vmem:[%s2 + $0x4] sm:$0xf]
  %v85 = vld [vmem:[%s2 + $0x8] sm:$0xf]
  %v86 = vld [vmem:[%s2 + $0xc] sm:$0xf]
  %v87 = vld [vmem:[%s2 + $0x10] sm:$0xf]
  %v88 = vld [vmem:[%s2 + $0x14] sm:$0xf]
  %v89 = vld [vmem:[%s2 + $0x18] sm:$0xf]
  %v90 = vld [vmem:[%s2 + $0x1c] sm:$0xf]
  %v91 = vld [vmem:[%s2 + $0x20] sm:$0xf]
  %v92 = vld [vmem:[%s2 + $0x24] sm:$0xf]
  %v93 = vld [vmem:[%s2 + $0x28] sm:$0xf]
  %v94 = vld [vmem:[%s2 + $0x2c] sm:$0xf]
  %v95 = vld [vmem:[%s2 + $0x30] sm:$0xf]
  %v96 = vld [vmem:[%s2 + $0x34] sm:$0xf]
  %v97 = vld [vmem:[%s2 + $0x38] sm:$0xf]
  %v98 = vld [vmem:[%s2 + $0x3c] sm:$0xf]
  %v115 = vunpack.c.l.b16 %v83
  %v116 = vunpack.c.l.b16 %v84
  %v117 = vunpack.c.l.b16 %v85
  %v118 = vunpack.c.l.b16 %v86
  %v119 = vunpack.c.l.b16 %v87
  %v120 = vunpack.c.l.b16 %v88
  %v121 = vunpack.c.l.b16 %v89
  %v122 = vunpack.c.l.b16 %v90
  %v123 = vunpack.c.l.b16 %v91
  %v124 = vunpack.c.l.b16 %v92
  %v125 = vunpack.c.l.b16 %v93
  %v126 = vunpack.c.l.b16 %v94
  %v127 = vunpack.c.l.b16 %v95
  %v128 = vunpack.c.l.b16 %v96
  %v129 = vunpack.c.l.b16 %v97
  %v130 = vunpack.c.l.b16 %v98
  %v131 = vpack.c.b16 %v116, %v115
  %v132 = vpack.c.b16 %v118, %v117
  %v133 = vpack.c.b16 %v120, %v119
  %v134 = vpack.c.b16 %v122, %v121
  %v135 = vpack.c.b16 %v124, %v123
  %v136 = vpack.c.b16 %v126, %v125
  %v137 = vpack.c.b16 %v128, %v127
  %v138 = vpack.c.b16 %v130, %v129
  %147 = vmatprep.subr.bf16.mxu0 0
  %148 = vmatpush1.bf16.msra.mxu0 %v131
  %149 = vmatprep.subr.bf16.mxu0 0
  %150 = vmatpush1.bf16.msra.mxu0 %v132
  %151 = vmatprep.subr.bf16.mxu0 0
  %152 = vmatpush1.bf16.msra.mxu0 %v133
  %153 = vmatprep.subr.bf16.mxu0 0
  %154 = vmatpush1.bf16.msra.mxu0 %v134
  %155 = vmatprep.subr.bf16.mxu0 0
  %156 = vmatpush1.bf16.msra.mxu0 %v135
  %157 = vmatprep.subr.bf16.mxu0 0
  %158 = vmatpush1.bf16.msra.mxu0 %v136
  %159 = vmatprep.subr.bf16.mxu0 0
  %160 = vmatpush1.bf16.msra.mxu0 %v137
  %161 = vmatprep.subr.bf16.mxu0 0
  %162 = vmatpush1.bf16.msra.mxu0 %v138
  %163 = vmatprep.subr.bf16.mxu0 0
  %164 = vmatpush1.bf16.msra.mxu0 0
  %165 = vmatprep.subr.bf16.mxu0 0
  %166 = vmatpush1.bf16.msra.mxu0 0
  %167 = vmatprep.subr.bf16.mxu0 0
  %168 = vmatpush1.bf16.msra.mxu0 0
  %169 = vmatprep.subr.bf16.mxu0 0
  %170 = vmatpush1.bf16.msra.mxu0 0
  %171 = vmatprep.subr.bf16.mxu0 0
  %172 = vmatpush1.bf16.msra.mxu0 0
  %173 = vmatprep.subr.bf16.mxu0 0
  %174 = vmatpush1.bf16.msra.mxu0 0
  %175 = vmatprep.subr.bf16.mxu0 0
  %176 = vmatpush1.bf16.msra.mxu0 0
  %177 = vmatprep.subr.bf16.mxu0 0
  %178 = vmatpush1.bf16.msra.mxu0 0
  %179 = vmatprep.mubr.bf16.mxu0 0
  %180 = vmatmul.mubr.bf16.gmra.mrb[0].mxu0 %v82
  %v181 = vpop.f32.mrb[0].mxu0
  %v182 = vadd.f32 0.0, %v181
  %v183 = vpop.f32.mrb[0].mxu0
  %v184 = vpop.f32.mrb[0].mxu0
  %v185 = vpop.f32.mrb[0].mxu0
  %186 = vdwg.mxu0
  %v187 = vmul.f32 %v182, %v81
  %v188 = vmax.f32 %v187, -1.0
  %v189 = vmin.f32 %v188, 1.0
  %190 = vst [vmem:[%s3] sm:$0xff] %v189
  // Predicated region
  $region14: #{multireso_forward.7} parent=0 // pred_check
    _
  $region15: #{multireso_forward.7} parent=0 // pred_check_branch
    %192 = sbr.rel (0) target = $region17
  $region16: #{multireso_forward.7} parent=0 // pred_region
    _
  $region17: #{multireso_forward.7} parent=0 // pred_fallthru
    _
  // Predicated region
  $region18: #{multireso_forward.7} parent=0 // pred_check
    _
  $region19: #{multireso_forward.7} parent=0 // pred_check_branch
    %194 = sbr.rel (0) target = $region21
  $region20: #{multireso_forward.7} parent=0 // pred_region
    _
  $region21: #{multireso_forward.7} parent=0 // pred_fallthru
    _

// kernel: multireso_forward.6
$region0: #{multireso_forward.6}
  #allocation0 [shape = 'u32[]', space=smem, size = 0x4, offset = 0x4, fixed_abs, tag = 'smem constant byte address 0x4 - core index']
  #allocation1 [shape = 'u32[144,128]{1,0:T(1,128)}', space=vmem, size = 0x12000, scoped, tag = 'internal scratch']
  %s0 = inlined_call_operand.vmem [shape: f32[16,32], index: 0, kind: input, shape index: {}]
  %s1 = inlined_call_operand.vmem [shape: bf16[32,128], index: 1, kind: input, shape index: {}]
  %s2 = inlined_call_operand.vmem [shape: bf16[128,128], index: 2, kind: input, shape index: {}]
  %s3 = inlined_call_operand.vmem [shape: f32[16,128], index: 3, kind: output, shape index: {}]
  %s4 = sld [smem:[#allocation0]]
  $region22: #{multireso_forward.6} parent=0
    _
  %s6 = ssub.s32 1, %s4
  %s7 = scalar_select 0, %s6, %s4
  // Predicated region
  $region2: #{multireso_forward.6} parent=0 // pred_check
    _
  $region3: #{multireso_forward.6} parent=0 // pred_check_branch
    %9 = sbr.rel (0) target = $region5
  $region4: #{multireso_forward.6} parent=0 // pred_region
    _
  $region5: #{multireso_forward.6} parent=0 // pred_fallthru
    _
  // Predicated region
  $region6: #{multireso_forward.6} parent=0 // pred_check
    _
  $region7: #{multireso_forward.6} parent=0 // pred_check_branch
    %11 = sbr.rel (0) target = $region9
  $region8: #{multireso_forward.6} parent=0 // pred_region
    _
  $region9: #{multireso_forward.6} parent=0 // pred_fallthru
    _
  // Predicated region
  $region10: #{multireso_forward.6} parent=0 // pred_check
    _
  $region11: #{multireso_forward.6} parent=0 // pred_check_branch
    %13 = sbr.rel (0) target = $region13
  $region12: #{multireso_forward.6} parent=0 // pred_region
    _
  $region13: #{multireso_forward.6} parent=0 // pred_fallthru
    _
  %v15 = vld [vmem:[%s0] sm:$0xff]
  %v16 = vld [vmem:[%s0 + $0x8] sm:$0xff]
  %v17 = vpack.c.bf16 %v16, %v15
  %v18 = vld [vmem:[%s1] sm:$0xf]
  %v19 = vld [vmem:[%s1 + $0x4] sm:$0xf]
  %v20 = vld [vmem:[%s1 + $0x8] sm:$0xf]
  %v21 = vld [vmem:[%s1 + $0xc] sm:$0xf]
  %v26 = vunpack.c.l.b16 %v18
  %v27 = vunpack.c.l.b16 %v19
  %v28 = vunpack.c.l.b16 %v20
  %v29 = vunpack.c.l.b16 %v21
  %v30 = vpack.c.b16 %v27, %v26
  %v31 = vpack.c.b16 %v29, %v28
  %vm34 = vcmask 261120
  %v36 = vsel %vm34, %v17, 0
  %38 = vmatprep.subr.bf16.mxu0 0
  %39 = vmatpush1.bf16.msra.mxu0 %v30
  %40 = vmatprep.subr.bf16.mxu0 0
  %41 = vmatpush1.bf16.msra.mxu0 %v31
  %42 = vmatprep.subr.bf16.mxu0 0
  %43 = vmatpush1.bf16.msra.mxu0 0
  %44 = vmatprep.subr.bf16.mxu0 0
  %45 = vmatpush1.bf16.msra.mxu0 0
  %46 = vmatprep.subr.bf16.mxu0 0
  %47 = vmatpush1.bf16.msra.mxu0 0
  %48 = vmatprep.subr.bf16.mxu0 0
  %49 = vmatpush1.bf16.msra.mxu0 0
  %50 = vmatprep.subr.bf16.mxu0 0
  %51 = vmatpush1.bf16.msra.mxu0 0
  %52 = vmatprep.subr.bf16.mxu0 0
  %53 = vmatpush1.bf16.msra.mxu0 0
  %54 = vmatprep.subr.bf16.mxu0 0
  %55 = vmatpush1.bf16.msra.mxu0 0
  %56 = vmatprep.subr.bf16.mxu0 0
  %57 = vmatpush1.bf16.msra.mxu0 0
  %58 = vmatprep.subr.bf16.mxu0 0
  %59 = vmatpush1.bf16.msra.mxu0 0
  %60 = vmatprep.subr.bf16.mxu0 0
  %61 = vmatpush1.bf16.msra.mxu0 0
  %62 = vmatprep.subr.bf16.mxu0 0
  %63 = vmatpush1.bf16.msra.mxu0 0
  %64 = vmatprep.subr.bf16.mxu0 0
  %65 = vmatpush1.bf16.msra.mxu0 0
  %66 = vmatprep.subr.bf16.mxu0 0
  %67 = vmatpush1.bf16.msra.mxu0 0
  %68 = vmatprep.subr.bf16.mxu0 0
  %69 = vmatpush1.bf16.msra.mxu0 0
  %70 = vmatprep.mubr.bf16.mxu0 0
  %71 = vmatmul.mubr.bf16.gmra.mrb[0].mxu0 %v36
  %v72 = vpop.f32.mrb[0].mxu0
  %v73 = vadd.f32 0.0, %v72
  %v74 = vpop.f32.mrb[0].mxu0
  %v75 = vpop.f32.mrb[0].mxu0
  %v76 = vadd.f32 0.0, %v75
  %v77 = vpop.f32.mrb[0].mxu0
  %78 = vdwg.mxu0
  %v79 = vmul.f32 %v73, %v73
  %v80 = vmul.f32 %v76, %v76
  %81 = vadd.xlane.f32.xlu0 %v79
  %v82 = vpop.xlane.xlu0 %81
  %83 = vadd.xlane.f32.xlu0 %v80
  %v84 = vpop.xlane.xlu0 %83
  %v85 = vadd.f32 %v82, 1e-12
  %v86 = vadd.f32 %v84, 1e-12
  %v87 = vrsqrt.pop %v85
  %v88 = vrsqrt.pop %v86
  %v89 = vpack.c.bf16 %v76, %v73
  %v90 = vld [vmem:[%s2] sm:$0xf]
  %v91 = vld [vmem:[%s2 + $0x4] sm:$0xf]
  %v92 = vld [vmem:[%s2 + $0x8] sm:$0xf]
  %v93 = vld [vmem:[%s2 + $0xc] sm:$0xf]
  %v94 = vld [vmem:[%s2 + $0x10] sm:$0xf]
  %v95 = vld [vmem:[%s2 + $0x14] sm:$0xf]
  %v96 = vld [vmem:[%s2 + $0x18] sm:$0xf]
  %v97 = vld [vmem:[%s2 + $0x1c] sm:$0xf]
  %v98 = vld [vmem:[%s2 + $0x20] sm:$0xf]
  %v99 = vld [vmem:[%s2 + $0x24] sm:$0xf]
  %v100 = vld [vmem:[%s2 + $0x28] sm:$0xf]
  %v101 = vld [vmem:[%s2 + $0x2c] sm:$0xf]
  %v102 = vld [vmem:[%s2 + $0x30] sm:$0xf]
  %v103 = vld [vmem:[%s2 + $0x34] sm:$0xf]
  %v104 = vld [vmem:[%s2 + $0x38] sm:$0xf]
  %v105 = vld [vmem:[%s2 + $0x3c] sm:$0xf]
  %v122 = vunpack.c.l.b16 %v90
  %v123 = vunpack.c.l.b16 %v91
  %v124 = vunpack.c.l.b16 %v92
  %v125 = vunpack.c.l.b16 %v93
  %v126 = vunpack.c.l.b16 %v94
  %v127 = vunpack.c.l.b16 %v95
  %v128 = vunpack.c.l.b16 %v96
  %v129 = vunpack.c.l.b16 %v97
  %v130 = vunpack.c.l.b16 %v98
  %v131 = vunpack.c.l.b16 %v99
  %v132 = vunpack.c.l.b16 %v100
  %v133 = vunpack.c.l.b16 %v101
  %v134 = vunpack.c.l.b16 %v102
  %v135 = vunpack.c.l.b16 %v103
  %v136 = vunpack.c.l.b16 %v104
  %v137 = vunpack.c.l.b16 %v105
  %v138 = vpack.c.b16 %v123, %v122
  %v139 = vpack.c.b16 %v125, %v124
  %v140 = vpack.c.b16 %v127, %v126
  %v141 = vpack.c.b16 %v129, %v128
  %v142 = vpack.c.b16 %v131, %v130
  %v143 = vpack.c.b16 %v133, %v132
  %v144 = vpack.c.b16 %v135, %v134
  %v145 = vpack.c.b16 %v137, %v136
  %154 = vmatprep.subr.bf16.mxu0 0
  %155 = vmatpush1.bf16.msra.mxu0 %v138
  %156 = vmatprep.subr.bf16.mxu0 0
  %157 = vmatpush1.bf16.msra.mxu0 %v139
  %158 = vmatprep.subr.bf16.mxu0 0
  %159 = vmatpush1.bf16.msra.mxu0 %v140
  %160 = vmatprep.subr.bf16.mxu0 0
  %161 = vmatpush1.bf16.msra.mxu0 %v141
  %162 = vmatprep.subr.bf16.mxu0 0
  %163 = vmatpush1.bf16.msra.mxu0 %v142
  %164 = vmatprep.subr.bf16.mxu0 0
  %165 = vmatpush1.bf16.msra.mxu0 %v143
  %166 = vmatprep.subr.bf16.mxu0 0
  %167 = vmatpush1.bf16.msra.mxu0 %v144
  %168 = vmatprep.subr.bf16.mxu0 0
  %169 = vmatpush1.bf16.msra.mxu0 %v145
  %170 = vmatprep.subr.bf16.mxu0 0
  %171 = vmatpush1.bf16.msra.mxu0 0
  %172 = vmatprep.subr.bf16.mxu0 0
  %173 = vmatpush1.bf16.msra.mxu0 0
  %174 = vmatprep.subr.bf16.mxu0 0
  %175 = vmatpush1.bf16.msra.mxu0 0
  %176 = vmatprep.subr.bf16.mxu0 0
  %177 = vmatpush1.bf16.msra.mxu0 0
  %178 = vmatprep.subr.bf16.mxu0 0
  %179 = vmatpush1.bf16.msra.mxu0 0
  %180 = vmatprep.subr.bf16.mxu0 0
  %181 = vmatpush1.bf16.msra.mxu0 0
  %182 = vmatprep.subr.bf16.mxu0 0
  %183 = vmatpush1.bf16.msra.mxu0 0
  %184 = vmatprep.subr.bf16.mxu0 0
  %185 = vmatpush1.bf16.msra.mxu0 0
  %186 = vmatprep.mubr.bf16.mxu0 0
  %187 = vmatmul.mubr.bf16.gmra.mrb[0].mxu0 %v89
  %v188 = vpop.f32.mrb[0].mxu0
  %v189 = vadd.f32 0.0, %v188
  %v190 = vpop.f32.mrb[0].mxu0
  %v191 = vpop.f32.mrb[0].mxu0
  %v192 = vadd.f32 0.0, %v191
  %v193 = vpop.f32.mrb[0].mxu0
  %194 = vdwg.mxu0
  %v195 = vmul.f32 %v189, %v87
  %v196 = vmul.f32 %v192, %v88
  %v197 = vmax.f32 %v195, -1.0
  %v198 = vmax.f32 %v196, -1.0
  %v199 = vmin.f32 %v197, 1.0
  %v200 = vmin.f32 %v198, 1.0
  %201 = vst [vmem:[%s3] sm:$0xff] %v199
  %202 = vst [vmem:[%s3 + $0x8] sm:$0xff] %v200
  // Predicated region
  $region14: #{multireso_forward.6} parent=0 // pred_check
    _
  $region15: #{multireso_forward.6} parent=0 // pred_check_branch
    %204 = sbr.rel (0) target = $region17
  $region16: #{multireso_forward.6} parent=0 // pred_region
    _
  $region17: #{multireso_forward.6} parent=0 // pred_fallthru
    _
  // Predicated region
  $region18: #{multireso_forward.6} parent=0 // pred_check
    _
  $region19: #{multireso_forward.6} parent=0 // pred_check_branch
    %206 = sbr.rel (0) target = $region21
  $region20: #{multireso_forward.6} parent=0 // pred_region
    _
  $region21: #{multireso_forward.6} parent=0 // pred_fallthru
    _

// kernel: multireso_forward.5
$region0: #{multireso_forward.5}
  #allocation0 [shape = 'u32[]', space=smem, size = 0x4, offset = 0x4, fixed_abs, tag = 'smem constant byte address 0x4 - core index']
  #allocation1 [shape = 'u32[144,128]{1,0:T(1,128)}', space=vmem, size = 0x12000, scoped, tag = 'internal scratch']
  #allocation2 [shape = 'f32[16,32]{1,0:T(8,128)}', space=vmem, size = 0x2000, scoped, tag = 'scratch operand']
  %s0 = inlined_call_operand.vmem [shape: f32[16,32], index: 0, kind: input, shape index: {}]
  %s1 = inlined_call_operand.vmem [shape: f32[2,2,6,256], index: 1, kind: input, shape index: {}]
  %s2 = inlined_call_operand.vmem [shape: bf16[2,2,32,256], index: 2, kind: input, shape index: {}]
  %s3 = inlined_call_operand.vmem [shape: bf16[2,2,8,8], index: 3, kind: input, shape index: {}]
  %s4 = inlined_call_operand.vmem [shape: f32[2,2,8,1], index: 4, kind: input, shape index: {}]
  %s5 = inlined_call_operand.vmem [shape: bf16[2,2,128,32], index: 5, kind: input, shape index: {}]
  %s6 = inlined_call_operand.vmem [shape: f32[2,16,32], index: 6, kind: output, shape index: {0}]
  %s7 = inlined_call_operand.vmem [shape: f32[2,2,1,32], index: 7, kind: output, shape index: {1}]
  %8 = xla_tuple %s6, %s7
  %s9 = sld [smem:[#allocation0]]
  $region77: #{multireso_forward.5} parent=0
    _
  %s11 = ssub.s32 1, %s9
  %s12 = scalar_select 0, %s11, %s9
  loop: start=0, step=1, limit=6
  $region2: #{multireso_forward.5} parent=0 // loop_pre_header
    _
  $region3: #{multireso_forward.5} parent=0 // loop_header
    %s14 = sphi 0, %s18
    %p15 = scmp.ge.s32.totalorder %s14, 6
    %s21 = sphi 0, %s40
    %s22 = sphi 0, %s36
    %s23 = sphi 0, %s32
    %s24 = sphi 0, %s21
    %s25 = sphi 0, %s22
    %s26 = sphi 0, %s23
    %s27 = sphi 0, %s24
    %s28 = sphi 0, %s25
    %s29 = sphi 0, %s26
    %s43 = sphi 0, %s45
    %s46 = sphi 0, %s43
    %s47 = sphi 0, %s46
    %s63 = sphi 0, %s47
    %s71 = sphi 0, %s73
    %s74 = sphi 0, %s71
    %s75 = sphi 0, %s74
    %s91 = sphi 0, %s75
    %s99 = sphi 0, %s101
    %s102 = sphi 0, %s99
    %s103 = sphi 0, %s102
    %s119 = sphi 0, %s103
    %s127 = sphi 0, %s129
    %s130 = sphi 0, %s127
    %s131 = sphi 0, %s130
    %s147 = sphi 0, %s131
    %s155 = sphi 0, %s157
    %s158 = sphi 0, %s155
    %s159 = sphi 0, %s158
    %s175 = sphi 0, %s159
    %s183 = sphi 0, %s185
    %s186 = sphi 0, %s183
    %s187 = sphi 0, %s186
    %s203 = sphi 0, %s187
    %s211 = sphi 0, %s213
    %s214 = sphi 0, %s211
    %s215 = sphi 0, %s214
    %s231 = sphi 0, %s215
    %s239 = sphi 0, %s241
    %s242 = sphi 0, %s239
    %s243 = sphi 0, %s242
    %s259 = sphi 0, %s243
  $region4: #{multireso_forward.5} parent=0 // loop_header_branch
    %17 = sbr.rel (%p15) target = $region8
  $region5: #{multireso_forward.5} parent=0 // loop_body
    %s19 = ssub.s32 %s14, 1
    %s20 = ssub.s32 %s14, 2
    %s30 = sadd.s32 1, %s23
    %p31 = scmp.ge.s32.totalorder %s30, 2
    %s32 = scalar_select %p31, 0, %s30
    %s33 = sadd.s32 1, %s22
    %s34 = scalar_select %p31, %s33, %s22
    %p35 = scmp.ge.s32.totalorder %s34, 1
    %s36 = scalar_select %p35, 0, %s34
    %s37 = sadd.s32 1, %s21
    %s38 = scalar_select %p35, %s37, %s21
    %p39 = scmp.ge.s32.totalorder %s38, 2
    %s40 = scalar_select %p39, 0, %s38
    %s41 = ssub.s32 %s22, %s36
    %p42 = scmp.eq.s32.totalorder %s41, 0
    %s44 = sadd.s32 %s43, 1
    %s45 = scalar_select %p42, %s43, %s44
    %p48 = pneg %p42
    %p49 = scmp.eq.s32.totalorder %s14, 3
    %p50 = por %p48, %p49
    %p51 = scmp.ne.s32.totalorder %s43, %s46
    %p52 = scmp.eq.s32.totalorder %s14, 0
    %p53 = por %p51, %p52
    %p54 = scmp.ne.s32.totalorder %s43, %s46
    %p55 = scmp.eq.s32.totalorder %s19, 3
    %p56 = por %p54, %p55
    %p57 = scmp.ne.s32.totalorder %s46, %s47
    %p58 = scmp.eq.s32.totalorder %s19, 0
    %p59 = por %p57, %p58
    %p60 = scmp.ne.s32.totalorder %s46, %s47
    %p61 = scmp.eq.s32.totalorder %s20, 3
    %p62 = por %p60, %p61
    %p64 = scmp.ne.s32.totalorder %s47, %s63
    %p65 = scmp.eq.s32.totalorder %s20, 0
    %p66 = por %p64, %p65
    %s67 = ssub.s32 %s21, %s40
    %s68 = ssub.s32 %s23, %s32
    %s69 = sor.u32 %s67, %s68
    %p70 = scmp.eq.s32.totalorder %s69, 0
    %s72 = sadd.s32 %s71, 1
    %s73 = scalar_select %p70, %s71, %s72
    %p76 = pneg %p70
    %p77 = scmp.eq.s32.totalorder %s14, 3
    %p78 = por %p76, %p77
    %p79 = scmp.ne.s32.totalorder %s71, %s74
    %p80 = scmp.eq.s32.totalorder %s14, 0
    %p81 = por %p79, %p80
    %p82 = scmp.ne.s32.totalorder %s71, %s74
    %p83 = scmp.eq.s32.totalorder %s19, 3
    %p84 = por %p82, %p83
    %p85 = scmp.ne.s32.totalorder %s74, %s75
    %p86 = scmp.eq.s32.totalorder %s19, 0
    %p87 = por %p85, %p86
    %p88 = scmp.ne.s32.totalorder %s74, %s75
    %p89 = scmp.eq.s32.totalorder %s20, 3
    %p90 = por %p88, %p89
    %p92 = scmp.ne.s32.totalorder %s75, %s91
    %p93 = scmp.eq.s32.totalorder %s20, 0
    %p94 = por %p92, %p93
    %s95 = ssub.s32 %s21, %s40
    %s96 = ssub.s32 %s23, %s32
    %s97 = sor.u32 %s95, %s96
    %p98 = scmp.eq.s32.totalorder %s97, 0
    %s100 = sadd.s32 %s99, 1
    %s101 = scalar_select %p98, %s99, %s100
    %p104 = pneg %p98
    %p105 = scmp.eq.s32.totalorder %s14, 3
    %p106 = por %p104, %p105
    %p107 = scmp.ne.s32.totalorder %s99, %s102
    %p108 = scmp.eq.s32.totalorder %s14, 0
    %p109 = por %p107, %p108
    %p110 = scmp.ne.s32.totalorder %s99, %s102
    %p111 = scmp.eq.s32.totalorder %s19, 3
    %p112 = por %p110, %p111
    %p113 = scmp.ne.s32.totalorder %s102, %s103
    %p114 = scmp.eq.s32.totalorder %s19, 0
    %p115 = por %p113, %p114
    %p116 = scmp.ne.s32.totalorder %s102, %s103
    %p117 = scmp.eq.s32.totalorder %s20, 3
    %p118 = por %p116, %p117
    %p120 = scmp.ne.s32.totalorder %s103, %s119
    %p121 = scmp.eq.s32.totalorder %s20, 0
    %p122 = por %p120, %p121
    %s123 = ssub.s32 %s21, %s40
    %s124 = ssub.s32 %s23, %s32
    %s125 = sor.u32 %s123, %s124
    %p126 = scmp.eq.s32.totalorder %s125, 0
    %s128 = sadd.s32 %s127, 1
    %s129 = scalar_select %p126, %s127, %s128
    %p132 = pneg %p126
    %p133 = scmp.eq.s32.totalorder %s14, 3
    %p134 = por %p132, %p133
    %p135 = scmp.ne.s32.totalorder %s127, %s130
    %p136 = scmp.eq.s32.totalorder %s14, 0
    %p137 = por %p135, %p136
    %p138 = scmp.ne.s32.totalorder %s127, %s130
    %p139 = scmp.eq.s32.totalorder %s19, 3
    %p140 = por %p138, %p139
    %p141 = scmp.ne.s32.totalorder %s130, %s131
    %p142 = scmp.eq.s32.totalorder %s19, 0
    %p143 = por %p141, %p142
    %p144 = scmp.ne.s32.totalorder %s130, %s131
    %p145 = scmp.eq.s32.totalorder %s20, 3
    %p146 = por %p144, %p145
    %p148 = scmp.ne.s32.totalorder %s131, %s147
    %p149 = scmp.eq.s32.totalorder %s20, 0
    %p150 = por %p148, %p149
    %s151 = ssub.s32 %s21, %s40
    %s152 = ssub.s32 %s23, %s32
    %s153 = sor.u32 %s151, %s152
    %p154 = scmp.eq.s32.totalorder %s153, 0
    %s156 = sadd.s32 %s155, 1
    %s157 = scalar_select %p154, %s155, %s156
    %p160 = pneg %p154
    %p161 = scmp.eq.s32.totalorder %s14, 3
    %p162 = por %p160, %p161
    %p163 = scmp.ne.s32.totalorder %s155, %s158
    %p164 = scmp.eq.s32.totalorder %s14, 0
    %p165 = por %p163, %p164
    %p166 = scmp.ne.s32.totalorder %s155, %s158
    %p167 = scmp.eq.s32.totalorder %s19, 3
    %p168 = por %p166, %p167
    %p169 = scmp.ne.s32.totalorder %s158, %s159
    %p170 = scmp.eq.s32.totalorder %s19, 0
    %p171 = por %p169, %p170
    %p172 = scmp.ne.s32.totalorder %s158, %s159
    %p173 = scmp.eq.s32.totalorder %s20, 3
    %p174 = por %p172, %p173
    %p176 = scmp.ne.s32.totalorder %s159, %s175
    %p177 = scmp.eq.s32.totalorder %s20, 0
    %p178 = por %p176, %p177
    %s179 = ssub.s32 %s21, %s40
    %s180 = ssub.s32 %s23, %s32
    %s181 = sor.u32 %s179, %s180
    %p182 = scmp.eq.s32.totalorder %s181, 0
    %s184 = sadd.s32 %s183, 1
    %s185 = scalar_select %p182, %s183, %s184
    %p188 = pneg %p182
    %p189 = scmp.eq.s32.totalorder %s14, 3
    %p190 = por %p188, %p189
    %p191 = scmp.ne.s32.totalorder %s183, %s186
    %p192 = scmp.eq.s32.totalorder %s14, 0
    %p193 = por %p191, %p192
    %p194 = scmp.ne.s32.totalorder %s183, %s186
    %p195 = scmp.eq.s32.totalorder %s19, 3
    %p196 = por %p194, %p195
    %p197 = scmp.ne.s32.totalorder %s186, %s187
    %p198 = scmp.eq.s32.totalorder %s19, 0
    %p199 = por %p197, %p198
    %p200 = scmp.ne.s32.totalorder %s186, %s187
    %p201 = scmp.eq.s32.totalorder %s20, 3
    %p202 = por %p200, %p201
    %p204 = scmp.ne.s32.totalorder %s187, %s203
    %p205 = scmp.eq.s32.totalorder %s20, 0
    %p206 = por %p204, %p205
    %s207 = ssub.s32 %s21, %s40
    %s208 = ssub.s32 %s22, %s36
    %s209 = sor.u32 %s207, %s208
    %p210 = scmp.eq.s32.totalorder %s209, 0
    %s212 = sadd.s32 %s211, 1
    %s213 = scalar_select %p210, %s211, %s212
    %p216 = pneg %p210
    %p217 = scmp.eq.s32.totalorder %s14, 3
    %p218 = por %p216, %p217
    %p219 = scmp.ne.s32.totalorder %s211, %s214
    %p220 = scmp.eq.s32.totalorder %s14, 0
    %p221 = por %p219, %p220
    %p222 = scmp.ne.s32.totalorder %s211, %s214
    %p223 = scmp.eq.s32.totalorder %s19, 3
    %p224 = por %p222, %p223
    %p225 = scmp.ne.s32.totalorder %s214, %s215
    %p226 = scmp.eq.s32.totalorder %s19, 0
    %p227 = por %p225, %p226
    %p228 = scmp.ne.s32.totalorder %s214, %s215
    %p229 = scmp.eq.s32.totalorder %s20, 3
    %p230 = por %p228, %p229
    %p232 = scmp.ne.s32.totalorder %s215, %s231
    %p233 = scmp.eq.s32.totalorder %s20, 0
    %p234 = por %p232, %p233
    %s235 = ssub.s32 %s21, %s40
    %s236 = ssub.s32 %s22, %s36
    %s237 = sor.u32 %s235, %s236
    %p238 = scmp.eq.s32.totalorder %s237, 0
    %s240 = sadd.s32 %s239, 1
    %s241 = scalar_select %p238, %s239, %s240
    %p244 = pneg %p238
    %p245 = scmp.eq.s32.totalorder %s14, 3
    %p246 = por %p244, %p245
    %p247 = scmp.ne.s32.totalorder %s239, %s242
    %p248 = scmp.eq.s32.totalorder %s14, 0
    %p249 = por %p247, %p248
    %p250 = scmp.ne.s32.totalorder %s239, %s242
    %p251 = scmp.eq.s32.totalorder %s19, 3
    %p252 = por %p250, %p251
    %p253 = scmp.ne.s32.totalorder %s242, %s243
    %p254 = scmp.eq.s32.totalorder %s19, 0
    %p255 = por %p253, %p254
    %p256 = scmp.ne.s32.totalorder %s242, %s243
    %p257 = scmp.eq.s32.totalorder %s20, 3
    %p258 = por %p256, %p257
    %p260 = scmp.ne.s32.totalorder %s243, %s259
    %p261 = scmp.eq.s32.totalorder %s20, 0
    %p262 = por %p260, %p261
    %p263 = scmp.le.s32.totalorder 1, %s14
    %p264 = scmp.lt.s32.totalorder %s14, 5
    %p265 = pnand %p263, %p264
    %p266 = pneg %p265
    // Predicated region
    $region9: #{multireso_forward.5} parent=5 // pred_check
      _
    $region10: #{multireso_forward.5} parent=5 // pred_check_branch
      %268 = sbr.rel (%p265) target = $region12
    $region11: #{multireso_forward.5} parent=5 // pred_region
      %s269 = ssub.s32 %s14, 1
      // Predicated region
      $region13: #{multireso_forward.5} parent=11 // pred_check
        %p270 = pneg %p59
      $region14: #{multireso_forward.5} parent=11 // pred_check_branch
        %272 = sbr.rel (%p270) target = $region16
      $region15: #{multireso_forward.5} parent=11 // pred_region
        %s273 = smul.u32 2, %s25
        %p274 = scmp.lt.s32.totalorder %s273, 1
        %s275 = scalar_select %p274, %s273, 1
        %s276 = smul.addr %s275, 8
        %s277 = scalar_lea.vmem %s0, %s276
        %s278 = smul.u32 2, %s25
      $region16: #{multireso_forward.5} parent=11 // pred_fallthru
        _
    $region12: #{multireso_forward.5} parent=5 // pred_fallthru
      _
    %p279 = scmp.lt.s32.totalorder %s14, 4
    // Predicated region
    $region17: #{multireso_forward.5} parent=5 // pred_check
      %p280 = pneg %p279
    $region18: #{multireso_forward.5} parent=5 // pred_check_branch
      %282 = sbr.rel (%p280) target = $region20
    $region19: #{multireso_forward.5} parent=5 // pred_region
      // Predicated region
      $region21: #{multireso_forward.5} parent=19 // pred_check
        %p283 = pneg %p81
      $region22: #{multireso_forward.5} parent=19 // pred_check_branch
        %285 = sbr.rel (%p283) target = $region24
      $region23: #{multireso_forward.5} parent=19 // pred_region
        %p286 = scmp.lt.s32.totalorder %s21, 1
        %s287 = scalar_select %p286, %s21, 1
        %p288 = scmp.lt.s32.totalorder %s23, 1
        %s289 = scalar_select %p288, %s23, 1
        %s290 = smul.addr %s289, 2
        %s291 = smul.addr %s287, 4
        %s292 = sadd.s32 %s290, %s291
        %s293 = smul.addr %s292, 8
        %s294 = scalar_lea.vmem %s1, %s293
      $region24: #{multireso_forward.5} parent=19 // pred_fallthru
        _
      // Predicated region
      $region25: #{multireso_forward.5} parent=19 // pred_check
        %p295 = pneg %p109
      $region26: #{multireso_forward.5} parent=19 // pred_check_branch
        %297 = sbr.rel (%p295) target = $region28
      $region27: #{multireso_forward.5} parent=19 // pred_region
        %p298 = scmp.lt.s32.totalorder %s21, 1
        %s299 = scalar_select %p298, %s21, 1
        %p300 = scmp.lt.s32.totalorder %s23, 1
        %s301 = scalar_select %p300, %s23, 1
        %s302 = smul.addr %s301, 8
        %s303 = smul.addr %s299, 16
        %s304 = sadd.s32 %s302, %s303
        %s305 = smul.addr %s304, 4
        %s306 = scalar_lea.vmem %s2, %s305
      $region28: #{multireso_forward.5} parent=19 // pred_fallthru
        _
      // Predicated region
      $region29: #{multireso_forward.5} parent=19 // pred_check
        %p307 = pneg %p137
      $region30: #{multireso_forward.5} parent=19 // pred_check_branch
        %309 = sbr.rel (%p307) target = $region32
      $region31: #{multireso_forward.5} parent=19 // pred_region
        %p310 = scmp.lt.s32.totalorder %s21, 1
        %s311 = scalar_select %p310, %s21, 1
        %p312 = scmp.lt.s32.totalorder %s23, 1
        %s313 = scalar_select %p312, %s23, 1
        %s314 = smul.addr %s311, 2
        %s315 = sadd.s32 %s313, %s314
        %s316 = smul.addr %s315, 4
        %s317 = scalar_lea.vmem %s3, %s316
      $region32: #{multireso_forward.5} parent=19 // pred_fallthru
        _
      // Predicated region
      $region33: #{multireso_forward.5} parent=19 // pred_check
        %p318 = pneg %p165
      $region34: #{multireso_forward.5} parent=19 // pred_check_branch
        %320 = sbr.rel (%p318) target = $region36
      $region35: #{multireso_forward.5} parent=19 // pred_region
        %p321 = scmp.lt.s32.totalorder %s21, 1
        %s322 = scalar_select %p321, %s21, 1
        %p323 = scmp.lt.s32.totalorder %s23, 1
        %s324 = scalar_select %p323, %s23, 1
        %s325 = smul.addr %s322, 2
        %s326 = sadd.s32 %s324, %s325
        %s327 = smul.addr %s326, 8
        %s328 = scalar_lea.vmem %s4, %s327
      $region36: #{multireso_forward.5} parent=19 // pred_fallthru
        _
      // Predicated region
      $region37: #{multireso_forward.5} parent=19 // pred_check
        %p329 = pneg %p193
      $region38: #{multireso_forward.5} parent=19 // pred_check_branch
        %331 = sbr.rel (%p329) target = $region40
      $region39: #{multireso_forward.5} parent=19 // pred_region
        %p332 = scmp.lt.s32.totalorder %s21, 1
        %s333 = scalar_select %p332, %s21, 1
        %p334 = scmp.lt.s32.totalorder %s23, 1
        %s335 = scalar_select %p334, %s23, 1
        %s336 = smul.addr %s335, 16
        %s337 = smul.addr %s333, 32
        %s338 = sadd.s32 %s336, %s337
        %s339 = smul.addr %s338, 4
        %s340 = scalar_lea.vmem %s5, %s339
      $region40: #{multireso_forward.5} parent=19 // pred_fallthru
        _
    $region20: #{multireso_forward.5} parent=5 // pred_fallthru
      _
    %p341 = scmp.le.s32.totalorder 1, %s14
    %p342 = scmp.lt.s32.totalorder %s14, 5
    %p343 = pnand %p341, %p342
    %p344 = pneg %p343
    // Predicated region
    $region41: #{multireso_forward.5} parent=5 // pred_check
      _
    $region42: #{multireso_forward.5} parent=5 // pred_check_branch
      %346 = sbr.rel (%p343) target = $region44
    $region43: #{multireso_forward.5} parent=5 // pred_region
      %s347 = ssub.s32 %s14, 1
      %s348 = smul.u32 2, %s25
      %p349 = scmp.lt.s32.totalorder %s348, 1
      %s350 = scalar_select %p349, %s348, 1
      %s351 = smul.addr %s350, 8
      %s352 = scalar_lea.vmem %s0, %s351
      %p353 = pneg %p59
      %p354 = pneg %p56
      %p355 = scmp.lt.s32.totalorder %s24, 1
      %s356 = scalar_select %p355, %s24, 1
      %p357 = scmp.lt.s32.totalorder %s26, 1
      %s358 = scalar_select %p357, %s26, 1
      %s359 = smul.addr %s358, 2
      %s360 = smul.addr %s356, 4
      %s361 = sadd.s32 %s359, %s360
      %s362 = smul.addr %s361, 8
      %s363 = scalar_lea.vmem %s1, %s362
      %p364 = pneg %p87
      %p365 = pneg %p84
      %p366 = scmp.lt.s32.totalorder %s24, 1
      %s367 = scalar_select %p366, %s24, 1
      %p368 = scmp.lt.s32.totalorder %s26, 1
      %s369 = scalar_select %p368, %s26, 1
      %s370 = smul.addr %s369, 8
      %s371 = smul.addr %s367, 16
      %s372 = sadd.s32 %s370, %s371
      %s373 = smul.addr %s372, 4
      %s374 = scalar_lea.vmem %s2, %s373
      %p375 = pneg %p115
      %p376 = pneg %p112
      %p377 = scmp.lt.s32.totalorder %s24, 1
      %s378 = scalar_select %p377, %s24, 1
      %p379 = scmp.lt.s32.totalorder %s26, 1
      %s380 = scalar_select %p379, %s26, 1
      %s381 = smul.addr %s378, 2
      %s382 = sadd.s32 %s380, %s381
      %s383 = smul.addr %s382, 4
      %s384 = scalar_lea.vmem %s3, %s383
      %p385 = pneg %p143
      %p386 = pneg %p140
      %p387 = scmp.lt.s32.totalorder %s24, 1
      %s388 = scalar_select %p387, %s24, 1
      %p389 = scmp.lt.s32.totalorder %s26, 1
      %s390 = scalar_select %p389, %s26, 1
      %s391 = smul.addr %s388, 2
      %s392 = sadd.s32 %s390, %s391
      %s393 = smul.addr %s392, 8
      %s394 = scalar_lea.vmem %s4, %s393
      %p395 = pneg %p171
      %p396 = pneg %p168
      %p397 = scmp.lt.s32.totalorder %s24, 1
      %s398 = scalar_select %p397, %s24, 1
      %p399 = scmp.lt.s32.totalorder %s26, 1
      %s400 = scalar_select %p399, %s26, 1
      %s401 = smul.addr %s400, 16
      %s402 = smul.addr %s398, 32
      %s403 = sadd.s32 %s401, %s402
      %s404 = smul.addr %s403, 4
      %s405 = scalar_lea.vmem %s5, %s404
      %p406 = pneg %p199
      %p407 = pneg %p196
      %p408 = pneg %p227
      %p409 = pneg %p224
      %s410 = smul.u32 2, %s25
      %p411 = scmp.lt.s32.totalorder %s24, 1
      %s412 = scalar_select %p411, %s24, 1
      %p413 = scmp.lt.s32.totalorder %s410, 1
      %s414 = scalar_select %p413, %s410, 1
      %s415 = smul.addr %s412, 2
      %s416 = sadd.s32 %s414, %s415
      %s417 = smul.addr %s416, 8
      %s418 = scalar_lea.vmem %s6, %s417
      %p419 = pneg %p255
      %p420 = pneg %p252
      %s421 = smul.u32 2, %s25
      %p422 = scmp.lt.s32.totalorder %s24, 1
      %s423 = scalar_select %p422, %s24, 1
      %p424 = scmp.lt.s32.totalorder %s421, 1
      %s425 = scalar_select %p424, %s421, 1
      %s426 = smul.addr %s423, 2
      %s427 = sadd.s32 %s425, %s426
      %s428 = scalar_lea.vmem %s7, %s427
      %s429 = smul.u32 2, %s25
      %p430 = scmp.lt.s32.totalorder %s429, 1
      %s431 = scalar_select %p430, %s429, 1
      %s432 = smul.addr %s431, 8
      %s433 = scalar_lea.vmem %s0, %s432
      %s434 = smul.u32 2, %s25
      %p435 = scmp.lt.s32.totalorder %s24, 1
      %s436 = scalar_select %p435, %s24, 1
      %p437 = scmp.lt.s32.totalorder %s26, 1
      %s438 = scalar_select %p437, %s26, 1
      %s439 = smul.addr %s438, 2
      %s440 = smul.addr %s436, 4
      %s441 = sadd.s32 %s439, %s440
      %s442 = smul.addr %s441, 8
      %s443 = scalar_lea.vmem %s1, %s442
      %p444 = scmp.lt.s32.totalorder %s24, 1
      %s445 = scalar_select %p444, %s24, 1
      %p446 = scmp.lt.s32.totalorder %s26, 1
      %s447 = scalar_select %p446, %s26, 1
      %s448 = smul.addr %s447, 8
      %s449 = smul.addr %s445, 16
      %s450 = sadd.s32 %s448, %s449
      %s451 = smul.addr %s450, 4
      %s452 = scalar_lea.vmem %s2, %s451
      %p453 = scmp.lt.s32.totalorder %s24, 1
      %s454 = scalar_select %p453, %s24, 1
      %p455 = scmp.lt.s32.totalorder %s26, 1
      %s456 = scalar_select %p455, %s26, 1
      %s457 = smul.addr %s454, 2
      %s458 = sadd.s32 %s456, %s457
      %s459 = smul.addr %s458, 4
      %s460 = scalar_lea.vmem %s3, %s459
      %p461 = scmp.lt.s32.totalorder %s24, 1
      %s462 = scalar_select %p461, %s24, 1
      %p463 = scmp.lt.s32.totalorder %s26, 1
      %s464 = scalar_select %p463, %s26, 1
      %s465 = smul.addr %s462, 2
      %s466 = sadd.s32 %s464, %s465
      %s467 = smul.addr %s466, 8
      %s468 = scalar_lea.vmem %s4, %s467
      %p469 = scmp.lt.s32.totalorder %s24, 1
      %s470 = scalar_select %p469, %s24, 1
      %p471 = scmp.lt.s32.totalorder %s26, 1
      %s472 = scalar_select %p471, %s26, 1
      %s473 = smul.addr %s472, 16
      %s474 = smul.addr %s470, 32
      %s475 = sadd.s32 %s473, %s474
      %s476 = smul.addr %s475, 4
      %s477 = scalar_lea.vmem %s5, %s476
      %s478 = smul.u32 2, %s25
      %p479 = scmp.lt.s32.totalorder %s24, 1
      %s480 = scalar_select %p479, %s24, 1
      %p481 = scmp.lt.s32.totalorder %s478, 1
      %s482 = scalar_select %p481, %s478, 1
      %s483 = smul.addr %s480, 2
      %s484 = sadd.s32 %s482, %s483
      %s485 = smul.addr %s484, 8
      %s486 = scalar_lea.vmem %s6, %s485
      %s487 = smul.u32 2, %s25
      %s488 = smul.u32 2, %s25
      %p489 = scmp.lt.s32.totalorder %s24, 1
      %s490 = scalar_select %p489, %s24, 1
      %p491 = scmp.lt.s32.totalorder %s488, 1
      %s492 = scalar_select %p491, %s488, 1
      %s493 = smul.addr %s490, 2
      %s494 = sadd.s32 %s492, %s493
      %s495 = scalar_lea.vmem %s7, %s494
      %s496 = smul.u32 2, %s25
      %p498 = scmp.eq.s32.totalorder %s26, 0
      // Predicated region
      $region45: #{multireso_forward.5} parent=43 // pred_check
        %p499 = pneg %p498
      $region46: #{multireso_forward.5} parent=43 // pred_check_branch
        %501 = sbr.rel (%p499) target = $region48
      $region47: #{multireso_forward.5} parent=43 // pred_region
        %v502 = vld [vmem:[%s433] sm:$0xff]
        %v503 = vld [vmem:[%s433 + $0x8] sm:$0xff]
        %vm504 = vcmask 261120
        %505 = vst.msk [vmem:[#allocation2] sm:$0xff] %vm504, %v502
        %506 = vst.msk [vmem:[#allocation2 + $0x8] sm:$0xff] %vm504, %v503
      $region48: #{multireso_forward.5} parent=43 // pred_fallthru
        _
      %v507 = vld [vmem:[#allocation2] sm:$0xff]
      %v508 = vld [vmem:[#allocation2 + $0x8] sm:$0xff]
      %v509 = vld [vmem:[%s443] sm:$0x3f]
      %v510 = vld [vmem:[%s443 + $0x8] sm:$0x3f]
      %vm511 = vcmask 261120
      %v512 = vsel %vm511, %v507, 0.0
      %513 = vadd.xlane.f32.xlu0 %v512
      %v514 = vpop.xlane.xlu0 %513
      %v515 = vsel %vm511, %v508, 0.0
      %516 = vadd.xlane.f32.xlu0 %v515
      %v517 = vpop.xlane.xlu0 %516
      %v518 = vrcp.pop 32.0
      %v519 = vmul.f32 %v514, %v518
      %v520 = vmul.f32 %v517, %v518
      %v521 = vmul.f32 %v507, %v507
      %v522 = vmul.f32 %v508, %v508
      %v523 = vsel %vm511, %v521, 0.0
      %524 = vadd.xlane.f32.xlu0 %v523
      %v525 = vpop.xlane.xlu0 %524
      %v526 = vsel %vm511, %v522, 0.0
      %527 = vadd.xlane.f32.xlu0 %v526
      %v528 = vpop.xlane.xlu0 %527
      %v529 = vmul.f32 %v525, %v518
      %v530 = vmul.f32 %v528, %v518
      %v531 = vmul.f32 %v519, %v519
      %v532 = vmul.f32 %v520, %v520
      %v533 = vsub.f32 %v529, %v531
      %v534 = vsub.f32 %v530, %v532
      %v535 = vmax.f32 %v533, 0.0
      %v536 = vmax.f32 %v534, 0.0
      %v537 = vsub.f32 %v507, %v519
      %v538 = vsub.f32 %v508, %v520
      %v539 = vadd.f32 %v535, 1e-05
      %v540 = vadd.f32 %v536, 1e-05
      %v541 = vrsqrt.pop %v539
      %v542 = vrsqrt.pop %v540
      %v543 = vmul.f32 %v537, %v541
      %v544 = vmul.f32 %v538, %v542
      %v545 = vlaneseq
      %v546 = vshrl.u32 %v545, 7
      %v547 = vsub.s32 0, %v546
      %v548 = vrot.slane %v509, %v547
      %v549 = vmul.f32 %v543, %v548
      %v550 = vmul.f32 %v544, %v548
      %v551 = vlaneseq
      %v552 = vshrl.u32 %v551, 7
      %v553 = vsub.s32 1, %v552
      %v554 = vrot.slane %v509, %v553
      %v555 = vadd.f32 %v549, %v554
      %v556 = vadd.f32 %v550, %v554
      %v557 = vpack.c.bf16 %v556, %v555
      %v558 = vld [vmem:[%s452] sm:$0xff]
      %v559 = vld [vmem:[%s452 + $0x8] sm:$0xff]
      %v560 = vld [vmem:[%s452 + $0x10] sm:$0xff]
      %v561 = vld [vmem:[%s452 + $0x18] sm:$0xff]
      %v562 = vlaneseq
      %v563 = vshrl.u32 %v562, 7
      %v564 = vsub.s32 2, %v563
      %v565 = vrot.slane %v509, %v564
      %v566 = vlaneseq
      %v567 = vshrl.u32 %v566, 7
      %v568 = vsub.s32 2, %v567
      %v569 = vrot.slane %v510, %v568
      %v574 = vunpack.c.l.b16 %v558
      %v575 = vunpack.c.h.b16 %v558
      %v576 = vunpack.c.l.b16 %v559
      %v577 = vunpack.c.h.b16 %v559
      %v578 = vunpack.c.l.b16 %v560
      %v579 = vunpack.c.h.b16 %v560
      %v580 = vunpack.c.l.b16 %v561
      %v581 = vunpack.c.h.b16 %v561
      %v582 = vpack.c.b16 %v576, %v574
      %v583 = vpack.c.b16 %v577, %v575
      %v584 = vpack.c.b16 %v580, %v578
      %v585 = vpack.c.b16 %v581, %v579
      %v591 = vsel %vm511, %v557, 0
      %593 = vmatprep.subr.bf16.mxu0 %v583
      %594 = vmatpush1.bf16.msra.mxu0 %v582
      %595 = vmatprep.subr.bf16.mxu0 %v585
      %596 = vmatpush1.bf16.msra.mxu0 %v584
      %597 = vmatprep.subr.bf16.mxu0 0
      %598 = vmatpush1.bf16.msra.mxu0 0
      %599 = vmatprep.subr.bf16.mxu0 0
      %600 = vmatpush1.bf16.msra.mxu0 0
      %601 = vmatprep.subr.bf16.mxu0 0
      %602 = vmatpush1.bf16.msra.mxu0 0
      %603 = vmatprep.subr.bf16.mxu0 0
      %604 = vmatpush1.bf16.msra.mxu0 0
      %605 = vmatprep.subr.bf16.mxu0 0
      %606 = vmatpush1.bf16.msra.mxu0 0
      %607 = vmatprep.subr.bf16.mxu0 0
      %608 = vmatpush1.bf16.msra.mxu0 0
      %609 = vmatprep.subr.bf16.mxu0 0
      %610 = vmatpush1.bf16.msra.mxu0 0
      %611 = vmatprep.subr.bf16.mxu0 0
      %612 = vmatpush1.bf16.msra.mxu0 0
      %613 = vmatprep.subr.bf16.mxu0 0
      %614 = vmatpush1.bf16.msra.mxu0 0
      %615 = vmatprep.subr.bf16.mxu0 0
      %616 = vmatpush1.bf16.msra.mxu0 0
      %617 = vmatprep.subr.bf16.mxu0 0
      %618 = vmatpush1.bf16.msra.mxu0 0
      %619 = vmatprep.subr.bf16.mxu0 0
      %620 = vmatpush1.bf16.msra.mxu0 0
      %621 = vmatprep.subr.bf16.mxu0 0
      %622 = vmatpush1.bf16.msra.mxu0 0
      %623 = vmatprep.subr.bf16.mxu0 0
      %624 = vmatpush1.bf16.msra.mxu0 0
      %625 = vmatprep.mubr.bf16.mxu0 0
      %626 = vmatmul.mubr.bf16.gmra.mrb[0].mxu0 %v591
      %v627 = vpop.f32.mrb[0].mxu0
      %v628 = vadd.f32 %v565, %v627
      %v629 = vpop.f32.mrb[0].mxu0
      %v630 = vadd.f32 %v569, %v629
      %v631 = vpop.f32.mrb[0].mxu0
      %v632 = vadd.f32 %v565, %v631
      %v633 = vpop.f32.mrb[0].mxu0
      %v634 = vadd.f32 %v569, %v633
      %635 = vdwg.mxu0
      %v636 = vmul.f32 %v628, %v628
      %v637 = vmul.f32 %v630, %v630
      %v638 = vmul.f32 %v632, %v632
      %v639 = vmul.f32 %v634, %v634
      %v640 = vmul.f32 %v628, %v636
      %v641 = vmul.f32 %v630, %v637
      %v642 = vmul.f32 %v632, %v638
      %v643 = vmul.f32 %v634, %v639
      %v644 = vmul.f32 %v640, 0.044715
      %v645 = vmul.f32 %v641, 0.044715
      %v646 = vmul.f32 %v642, 0.044715
      %v647 = vmul.f32 %v643, 0.044715
      %v648 = vadd.f32 %v628, %v644
      %v649 = vadd.f32 %v630, %v645
      %v650 = vadd.f32 %v632, %v646
      %v651 = vadd.f32 %v634, %v647
      %v652 = vmul.f32 %v648, 0.7978846
      %v653 = vmul.f32 %v649, 0.7978846
      %v654 = vmul.f32 %v650, 0.7978846
      %v655 = vmul.f32 %v651, 0.7978846
      %v656 = vtanh.pop %v652
      %v657 = vtanh.pop %v653
      %v658 = vtanh.pop %v654
      %v659 = vtanh.pop %v655
      %v660 = vadd.f32 %v656, 1.0
      %v661 = vadd.f32 %v657, 1.0
      %v662 = vadd.f32 %v658, 1.0
      %v663 = vadd.f32 %v659, 1.0
      %v664 = vmul.f32 %v660, 0.5
      %v665 = vmul.f32 %v661, 0.5
      %v666 = vmul.f32 %v662, 0.5
      %v667 = vmul.f32 %v663, 0.5
      %v668 = vmul.f32 %v628, %v664
      %v669 = vmul.f32 %v630, %v665
      %v670 = vmul.f32 %v632, %v666
      %v671 = vmul.f32 %v634, %v667
      %672 = vadd.xlane.f32.xlu0 %v669
      %v673 = vpop.xlane.xlu0 %672
      %674 = vadd.xlane.f32.xlu0 %v671
      %v675 = vpop.xlane.xlu0 %674
      %v676 = vmul.f32 %v673, 0.125
      %v677 = vmul.f32 %v675, 0.125
      %v678 = vmul.f32 %v669, %v669
      %v679 = vmul.f32 %v671, %v671
      %680 = vadd.xlane.f32.xlu0 %v678
      %v681 = vpop.xlane.xlu0 %680
      %682 = vadd.xlane.f32.xlu0 %v679
      %v683 = vpop.xlane.xlu0 %682
      %v684 = vmul.f32 %v681, 0.125
      %v685 = vmul.f32 %v683, 0.125
      %v686 = vmul.f32 %v676, %v676
      %v687 = vmul.f32 %v677, %v677
      %v688 = vsub.f32 %v684, %v686
      %v689 = vsub.f32 %v685, %v687
      %v690 = vmax.f32 %v688, 0.0
      %v691 = vmax.f32 %v689, 0.0
      %v692 = vsub.f32 %v669, %v676
      %v693 = vsub.f32 %v671, %v677
      %v694 = vadd.f32 %v690, 1e-05
      %v695 = vadd.f32 %v691, 1e-05
      %v696 = vrsqrt.pop %v694
      %v697 = vrsqrt.pop %v695
      %v698 = vmul.f32 %v692, %v696
      %v699 = vmul.f32 %v693, %v697
      %v700 = vlaneseq
      %v701 = vshrl.u32 %v700, 7
      %v702 = vsub.s32 3, %v701
      %v703 = vrot.slane %v509, %v702
      %v704 = vmul.f32 %v698, %v703
      %v705 = vmul.f32 %v699, %v703
      %v706 = vlaneseq
      %v707 = vshrl.u32 %v706, 7
      %v708 = vsub.s32 4, %v707
      %v709 = vrot.slane %v509, %v708
      %v710 = vadd.f32 %v704, %v709
      %v711 = vadd.f32 %v705, %v709
      %v712 = vld [vmem:[%s460] sm:$0xf]
      %v713 = vld [vmem:[%s468] sm:$0xff]
      %v714 = vpack.c.bf16 %v710, %v710
      %716 = vset.pattern.permute.xlu0 0
      %717 = vperm.xlu0 %716, %v713
      %v718 = vpop.permute.xlu0 %717
      %vm720 = vcmask 64512
      %v722 = vsel %vm720, %v712, 0
      %vm724 = vcmask 1043456
      %v726 = vsel %vm724, %v714, 0
      %728 = vmatprep.subr.bf16.mxu0 0
      %729 = vmatpush1.bf16.msra.mxu0 %v726
      %730 = vmatprep.subr.bf16.mxu0 0
      %731 = vmatpush1.bf16.msra.mxu0 0
      %732 = vmatprep.subr.bf16.mxu0 0
      %733 = vmatpush1.bf16.msra.mxu0 0
      %734 = vmatprep.subr.bf16.mxu0 0
      %735 = vmatpush1.bf16.msra.mxu0 0
      %736 = vmatprep.subr.bf16.mxu0 0
      %737 = vmatpush1.bf16.msra.mxu0 0
      %738 = vmatprep.subr.bf16.mxu0 0
      %739 = vmatpush1.bf16.msra.mxu0 0
      %740 = vmatprep.subr.bf16.mxu0 0
      %741 = vmatpush1.bf16.msra.mxu0 0
      %742 = vmatprep.subr.bf16.mxu0 0
      %743 = vmatpush1.bf16.msra.mxu0 0
      %744 = vmatprep.subr.bf16.mxu0 0
      %745 = vmatpush1.bf16.msra.mxu0 0
      %746 = vmatprep.subr.bf16.mxu0 0
      %747 = vmatpush1.bf16.msra.mxu0 0
      %748 = vmatprep.subr.bf16.mxu0 0
      %749 = vmatpush1.bf16.msra.mxu0 0
      %750 = vmatprep.subr.bf16.mxu0 0
      %751 = vmatpush1.bf16.msra.mxu0 0
      %752 = vmatprep.subr.bf16.mxu0 0
      %753 = vmatpush1.bf16.msra.mxu0 0
      %754 = vmatprep.subr.bf16.mxu0 0
      %755 = vmatpush1.bf16.msra.mxu0 0
      %756 = vmatprep.subr.bf16.mxu0 0
      %757 = vmatpush1.bf16.msra.mxu0 0
      %758 = vmatprep.subr.bf16.mxu0 0
      %759 = vmatpush1.bf16.msra.mxu0 0
      %760 = vmatprep.mubr.bf16.mxu0 0
      %761 = vmatmul.mubr.bf16.gmra.mrb[0].mxu0 %v722
      %v762 = vpop.f32.mrb[0].mxu0
      %v763 = vadd.f32 %v718, %v762
      %v764 = vpop.f32.mrb[0].mxu0
      %v765 = vpop.f32.mrb[0].mxu0
      %v766 = vpop.f32.mrb[0].mxu0
      %767 = vdwg.mxu0
      %v768 = vpack.c.bf16 %v711, %v711
      %v770 = vsel %vm724, %v768, 0
      %772 = vmatprep.subr.bf16.mxu0 0
      %773 = vmatpush1.bf16.msra.mxu0 %v770
      %774 = vmatprep.subr.bf16.mxu0 0
      %775 = vmatpush1.bf16.msra.mxu0 0
      %776 = vmatprep.subr.bf16.mxu0 0
      %777 = vmatpush1.bf16.msra.mxu0 0
      %778 = vmatprep.subr.bf16.mxu0 0
      %779 = vmatpush1.bf16.msra.mxu0 0
      %780 = vmatprep.subr.bf16.mxu0 0
      %781 = vmatpush1.bf16.msra.mxu0 0
      %782 = vmatprep.subr.bf16.mxu0 0
      %783 = vmatpush1.bf16.msra.mxu0 0
      %784 = vmatprep.subr.bf16.mxu0 0
      %785 = vmatpush1.bf16.msra.mxu0 0
      %786 = vmatprep.subr.bf16.mxu0 0
      %787 = vmatpush1.bf16.msra.mxu0 0
      %788 = vmatprep.subr.bf16.mxu0 0
      %789 = vmatpush1.bf16.msra.mxu0 0
      %790 = vmatprep.subr.bf16.mxu0 0
      %791 = vmatpush1.bf16.msra.mxu0 0
      %792 = vmatprep.subr.bf16.mxu0 0
      %793 = vmatpush1.bf16.msra.mxu0 0
      %794 = vmatprep.subr.bf16.mxu0 0
      %795 = vmatpush1.bf16.msra.mxu0 0
      %796 = vmatprep.subr.bf16.mxu0 0
      %797 = vmatpush1.bf16.msra.mxu0 0
      %798 = vmatprep.subr.bf16.mxu0 0
      %799 = vmatpush1.bf16.msra.mxu0 0
      %800 = vmatprep.subr.bf16.mxu0 0
      %801 = vmatpush1.bf16.msra.mxu0 0
      %802 = vmatprep.subr.bf16.mxu0 0
      %803 = vmatpush1.bf16.msra.mxu0 0
      %804 = vmatprep.mubr.bf16.mxu0 0
      %805 = vmatmul.mubr.bf16.gmra.mrb[0].mxu0 %v722
      %v806 = vpop.f32.mrb[0].mxu0
      %v807 = vadd.f32 %v718, %v806
      %v808 = vpop.f32.mrb[0].mxu0
      %v809 = vpop.f32.mrb[0].mxu0
      %v810 = vpop.f32.mrb[0].mxu0
      %811 = vdwg.mxu0
      %v812 = vmul.f32 %v668, %v763
      %v813 = vmul.f32 %v670, %v807
      %v814 = vpack.c.bf16 %v813, %v812
      %v815 = vld [vmem:[%s477] sm:$0xf]
      %v816 = vld [vmem:[%s477 + $0x4] sm:$0xf]
      %v817 = vld [vmem:[%s477 + $0x8] sm:$0xf]
      %v818 = vld [vmem:[%s477 + $0xc] sm:$0xf]
      %v819 = vld [vmem:[%s477 + $0x10] sm:$0xf]
      %v820 = vld [vmem:[%s477 + $0x14] sm:$0xf]
      %v821 = vld [vmem:[%s477 + $0x18] sm:$0xf]
      %v822 = vld [vmem:[%s477 + $0x1c] sm:$0xf]
      %v823 = vld [vmem:[%s477 + $0x20] sm:$0xf]
      %v824 = vld [vmem:[%s477 + $0x24] sm:$0xf]
      %v825 = vld [vmem:[%s477 + $0x28] sm:$0xf]
      %v826 = vld [vmem:[%s477 + $0x2c] sm:$0xf]
      %v827 = vld [vmem:[%s477 + $0x30] sm:$0xf]
      %v828 = vld [vmem:[%s477 + $0x34] sm:$0xf]
      %v829 = vld [vmem:[%s477 + $0x38] sm:$0xf]
      %v830 = vld [vmem:[%s477 + $0x3c] sm:$0xf]
      %v831 = vlaneseq
      %v832 = vshrl.u32 %v831, 7
      %v833 = vsub.s32 5, %v832
      %v834 = vrot.slane %v509, %v833
      %v851 = vunpack.c.l.b16 %v815
      %v852 = vunpack.c.l.b16 %v816
      %v853 = vunpack.c.l.b16 %v817
      %v854 = vunpack.c.l.b16 %v818
      %v855 = vunpack.c.l.b16 %v819
      %v856 = vunpack.c.l.b16 %v820
      %v857 = vunpack.c.l.b16 %v821
      %v858 = vunpack.c.l.b16 %v822
      %v859 = vunpack.c.l.b16 %v823
      %v860 = vunpack.c.l.b16 %v824
      %v861 = vunpack.c.l.b16 %v825
      %v862 = vunpack.c.l.b16 %v826
      %v863 = vunpack.c.l.b16 %v827
      %v864 = vunpack.c.l.b16 %v828
      %v865 = vunpack.c.l.b16 %v829
      %v866 = vunpack.c.l.b16 %v830
      %v867 = vpack.c.b16 %v852, %v851
      %v868 = vpack.c.b16 %v854, %v853
      %v869 = vpack.c.b16 %v856, %v855
      %v870 = vpack.c.b16 %v858, %v857
      %v871 = vpack.c.b16 %v860, %v859
      %v872 = vpack.c.b16 %v862, %v861
      %v873 = vpack.c.b16 %v864, %v863
      %v874 = vpack.c.b16 %v866, %v865
      %883 = vmatprep.subr.bf16.mxu0 0
      %884 = vmatpush1.bf16.msra.mxu0 %v867
      %885 = vmatprep.subr.bf16.mxu0 0
      %886 = vmatpush1.bf16.msra.mxu0 %v868
      %887 = vmatprep.subr.bf16.mxu0 0
      %888 = vmatpush1.bf16.msra.mxu0 %v869
      %889 = vmatprep.subr.bf16.mxu0 0
      %890 = vmatpush1.bf16.msra.mxu0 %v870
      %891 = vmatprep.subr.bf16.mxu0 0
      %892 = vmatpush1.bf16.msra.mxu0 %v871
      %893 = vmatprep.subr.bf16.mxu0 0
      %894 = vmatpush1.bf16.msra.mxu0 %v872
      %895 = vmatprep.subr.bf16.mxu0 0
      %896 = vmatpush1.bf16.msra.mxu0 %v873
      %897 = vmatprep.subr.bf16.mxu0 0
      %898 = vmatpush1.bf16.msra.mxu0 %v874
      %899 = vmatprep.subr.bf16.mxu0 0
      %900 = vmatpush1.bf16.msra.mxu0 0
      %901 = vmatprep.subr.bf16.mxu0 0
      %902 = vmatpush1.bf16.msra.mxu0 0
      %903 = vmatprep.subr.bf16.mxu0 0
      %904 = vmatpush1.bf16.msra.mxu0 0
      %905 = vmatprep.subr.bf16.mxu0 0
      %906 = vmatpush1.bf16.msra.mxu0 0
      %907 = vmatprep.subr.bf16.mxu0 0
      %908 = vmatpush1.bf16.msra.mxu0 0
      %909 = vmatprep.subr.bf16.mxu0 0
      %910 = vmatpush1.bf16.msra.mxu0 0
      %911 = vmatprep.subr.bf16.mxu0 0
      %912 = vmatpush1.bf16.msra.mxu0 0
      %913 = vmatprep.subr.bf16.mxu0 0
      %914 = vmatpush1.bf16.msra.mxu0 0
      %915 = vmatprep.mubr.bf16.mxu0 0
      %916 = vmatmul.mubr.bf16.gmra.mrb[0].mxu0 %v814
      %v917 = vpop.f32.mrb[0].mxu0
      %v918 = vadd.f32 %v834, %v917
      %v919 = vpop.f32.mrb[0].mxu0
      %v920 = vpop.f32.mrb[0].mxu0
      %v921 = vadd.f32 %v834, %v920
      %v922 = vpop.f32.mrb[0].mxu0
      %923 = vdwg.mxu0
      %v924 = vadd.f32 %v507, %v918
      %v925 = vadd.f32 %v508, %v921
      %p926 = scmp.lt.s32.totalorder %s26, 1
      // Predicated region
      $region49: #{multireso_forward.5} parent=43 // pred_check
        %p927 = pneg %p926
      $region50: #{multireso_forward.5} parent=43 // pred_check_branch
        %929 = sbr.rel (%p927) target = $region52
      $region51: #{multireso_forward.5} parent=43 // pred_region
        %930 = vst.msk [vmem:[#allocation2] sm:$0xff] %vm511, %v924
        %931 = vst.msk [vmem:[#allocation2 + $0x8] sm:$0xff] %vm511, %v925
      $region52: #{multireso_forward.5} parent=43 // pred_fallthru
        _
      %p932 = scmp.eq.s32.totalorder %s26, 1
      // Predicated region
      $region53: #{multireso_forward.5} parent=43 // pred_check
        %p933 = pneg %p932
      $region54: #{multireso_forward.5} parent=43 // pred_check_branch
        %935 = sbr.rel (%p933) target = $region56
      $region55: #{multireso_forward.5} parent=43 // pred_region
        %936 = vst.msk [vmem:[%s486] sm:$0xff] %vm511, %v924
        %937 = vst.msk [vmem:[%s486 + $0x8] sm:$0xff] %vm511, %v925
        %v938 = vsel %vm511, %v924, 0.0
        %v939 = vrot.slane %v938, 4
        %v940 = vadd.f32 %v938, %v939
        %v941 = vrot.slane %v940, 2
        %v942 = vadd.f32 %v940, %v941
        %v943 = vrot.slane %v942, 1
        %v944 = vadd.f32 %v942, %v943
        %v945 = vrcp.pop 8.0
        %v946 = vmul.f32 %v944, %v945
        %vm947 = vcmask 253952
        %948 = vst.msk [vmem:[%s495] sm:$0x1] %vm947, %v946
        %v949 = vsel %vm511, %v925, 0.0
        %v950 = vrot.slane %v949, 4
        %v951 = vadd.f32 %v949, %v950
        %v952 = vrot.slane %v951, 2
        %v953 = vadd.f32 %v951, %v952
        %v954 = vrot.slane %v953, 1
        %v955 = vadd.f32 %v953, %v954
        %v956 = vmul.f32 %v955, %v945
        %s957 = scalar_lea.vmem %s495, 1
        %958 = vst.msk [vmem:[%s957] sm:$0x1] %vm947, %v956
      $region56: #{multireso_forward.5} parent=43 // pred_fallthru
        _
      %s959 = smul.u32 2, %s25
      %p960 = scmp.lt.s32.totalorder %s24, 1
      %s961 = scalar_select %p960, %s24, 1
      %p962 = scmp.lt.s32.totalorder %s959, 1
      %s963 = scalar_select %p962, %s959, 1
      %s964 = smul.addr %s961, 2
      %s965 = sadd.s32 %s963, %s964
      %s966 = smul.addr %s965, 8
      %s967 = scalar_lea.vmem %s6, %s966
      %s968 = smul.u32 2, %s25
      %p969 = scmp.lt.s32.totalorder %s24, 1
      %s970 = scalar_select %p969, %s24, 1
      %p971 = scmp.lt.s32.totalorder %s968, 1
      %s972 = scalar_select %p971, %s968, 1
      %s973 = smul.addr %s970, 2
      %s974 = sadd.s32 %s972, %s973
      %s975 = scalar_lea.vmem %s7, %s974
      // Predicated region
      $region57: #{multireso_forward.5} parent=43 // pred_check
        %p976 = pneg %p224
      $region58: #{multireso_forward.5} parent=43 // pred_check_branch
        %978 = sbr.rel (%p976) target = $region60
      $region59: #{multireso_forward.5} parent=43 // pred_region
        %s979 = smul.u32 2, %s25
      $region60: #{multireso_forward.5} parent=43 // pred_fallthru
        _
      // Predicated region
      $region61: #{multireso_forward.5} parent=43 // pred_check
        %p980 = pneg %p252
      $region62: #{multireso_forward.5} parent=43 // pred_check_branch
        %982 = sbr.rel (%p980) target = $region64
      $region63: #{multireso_forward.5} parent=43 // pred_region
        %s983 = smul.u32 2, %s25
      $region64: #{multireso_forward.5} parent=43 // pred_fallthru
        _
    $region44: #{multireso_forward.5} parent=5 // pred_fallthru
      _
    %p984 = scmp.le.s32.totalorder 2, %s14
    // Predicated region
    $region65: #{multireso_forward.5} parent=5 // pred_check
      %p985 = pneg %p984
    $region66: #{multireso_forward.5} parent=5 // pred_check_branch
      %987 = sbr.rel (%p985) target = $region68
    $region67: #{multireso_forward.5} parent=5 // pred_region
      %s988 = ssub.s32 %s14, 2
      // Predicated region
      $region69: #{multireso_forward.5} parent=67 // pred_check
        %p989 = pneg %p230
      $region70: #{multireso_forward.5} parent=67 // pred_check_branch
        %991 = sbr.rel (%p989) target = $region72
      $region71: #{multireso_forward.5} parent=67 // pred_region
        %s992 = smul.u32 2, %s28
        %p993 = scmp.lt.s32.totalorder %s27, 1
        %s994 = scalar_select %p993, %s27, 1
        %p995 = scmp.lt.s32.totalorder %s992, 1
        %s996 = scalar_select %p995, %s992, 1
        %s997 = smul.addr %s994, 2
        %s998 = sadd.s32 %s996, %s997
        %s999 = smul.addr %s998, 8
        %s1000 = scalar_lea.vmem %s6, %s999
      $region72: #{multireso_forward.5} parent=67 // pred_fallthru
        _
      // Predicated region
      $region73: #{multireso_forward.5} parent=67 // pred_check
        %p1001 = pneg %p258
      $region74: #{multireso_forward.5} parent=67 // pred_check_branch
        %1003 = sbr.rel (%p1001) target = $region76
      $region75: #{multireso_forward.5} parent=67 // pred_region
        %s1004 = smul.u32 2, %s28
        %p1005 = scmp.lt.s32.totalorder %s27, 1
        %s1006 = scalar_select %p1005, %s27, 1
        %p1007 = scmp.lt.s32.totalorder %s1004, 1
        %s1008 = scalar_select %p1007, %s1004, 1
        %s1009 = smul.addr %s1006, 2
        %s1010 = sadd.s32 %s1008, %s1009
        %s1011 = scalar_lea.vmem %s7, %s1010
      $region76: #{multireso_forward.5} parent=67 // pred_fallthru
        _
    $region68: #{multireso_forward.5} parent=5 // pred_fallthru
      _
  $region6: #{multireso_forward.5} parent=0 // loop_footer
    %s18 = sadd.s32 1, %s14
  $region7: #{multireso_forward.5} parent=0 // loop_footer_branch
    %13 = sbr.rel target = $region3
  $region8: #{multireso_forward.5} parent=0 // loop_exit
    _

</llo_original>
